<compile_context>
chip_gen: v7x
topology: tpu7x:2x2x1
jax: 0.10.0
libtpu: 0.0.40
codegen_flags: <defaults>
</compile_context>

<pallas_src>
import functools

import jax
import jax.numpy as jnp
from jax import lax
from jax.experimental import pallas as pl
from jax.experimental.pallas import tpu as pltpu

K = 4          # conv-transpose kernel size (fixed by the module)
EPS = 1e-5     # BatchNorm2d default eps


# --------------------------------------------------------------------------- kernel
def fused_layer_kernel(*refs, act, inv_count):
    """GEMM + (training-mode BatchNorm + ReLU | Sigmoid), whole layer in VMEM."""
    if act == "bn_relu":
        x_ref, w_ref, p_ref, gb_ref, o_ref = refs
    else:
        x_ref, w_ref, o_ref = refs

    y = jnp.dot(x_ref[...], w_ref[...], preferred_element_type=jnp.float32)

    if act == "bn_relu":
        # Columns are (phase..., co) with co fastest.  p_ref is the 0/1 "same channel"
        # projection, so a [1, Nc] @ [Nc, Nc] matmul both folds the phase groups and
        # re-broadcasts the per-channel statistic to every column (no in-kernel reshape).
        mean = jnp.dot(jnp.sum(y, axis=0, keepdims=True), p_ref[...],
                       preferred_element_type=jnp.float32) * inv_count
        d = y - mean
        var = jnp.dot(jnp.sum(d * d, axis=0, keepdims=True), p_ref[...],
                      preferred_element_type=jnp.float32) * inv_count
        o_ref[...] = jnp.maximum(
            d * lax.rsqrt(var + EPS) * gb_ref[0:1, :] + gb_ref[1:2, :], 0.0)
    elif act == "sigmoid":
        o_ref[...] = jax.nn.sigmoid(y)
    else:
        o_ref[...] = y


# ------------------------------------------------------------------------- wrapper
def fused_layer(x2d, wmat, gamma=None, beta=None, *, fold, act):
    """One fused layer: [M, Kd] @ [Kd, Nc] -> BN/ReLU or Sigmoid -> [M, Nc].

    `fold` column groups of size Nc//fold share one BatchNorm channel (co fastest).
    """
    m, kd = x2d.shape
    nc = wmat.shape[1]
    co = nc // fold
    kern = functools.partial(fused_layer_kernel, act=act, inv_count=1.0 / (m * fold))

    args = [x2d, wmat]
    in_specs = [pl.BlockSpec((m, kd), lambda i: (0, 0)),
                pl.BlockSpec((kd, nc), lambda i: (0, 0))]
    if act == "bn_relu":
        ch = jnp.arange(nc) % co
        pmat = (ch[:, None] == ch[None, :]).astype(jnp.float32)        # [Nc, Nc] fold/bcast
        gb = jnp.stack([jnp.tile(gamma, fold), jnp.tile(beta, fold)])  # [2, Nc], co fastest
        args += [pmat, gb]
        in_specs += [pl.BlockSpec((nc, nc), lambda i: (0, 0)),
                     pl.BlockSpec((2, nc), lambda i: (0, 0))]

    return pl.pallas_call(
        kern,
        out_shape=jax.ShapeDtypeStruct((m, nc), jnp.float32),
        grid=(1,),
        in_specs=in_specs,
        out_specs=pl.BlockSpec((m, nc), lambda i: (0, 0)),
        compiler_params=pltpu.CompilerParams(vmem_limit_bytes=32 * 1024 * 1024),
    )(*args)


# ---------------------------------------------------------- deconv layout plumbing
# (kh, dh) pairs feeding output row phase r: oh = 2*m + r needs kh = 2*(m - h) + r + 1,
# so r=0 -> (kh=1, h=m), (kh=3, h=m-1); r=1 -> (kh=0, h=m+1), (kh=2, h=m).
_PHASE_TAPS = {0: ((1, 0), (3, -1)), 1: ((0, 1), (2, 0))}


def im2col3(a):
    """a: NHWC [N, H, W, Ci] -> [N*H*W, 9*Ci]; 3x3 zero-padded patches, order (dh, dw, ci)."""
    n, h, w, ci = a.shape
    ap = jnp.pad(a, ((0, 0), (1, 1), (1, 1), (0, 0)))
    cols = [ap[:, dh:dh + h, dw:dw + w, :] for dh in range(3) for dw in range(3)]
    return jnp.stack(cols, axis=3).reshape(n * h * w, 9 * ci)


def build_scatter_weight(w):
    """ConvTranspose2d weight [Ci, Co, 4, 4] -> [9*Ci, 4*Co] scatter-GEMM matrix.

    Rows ordered (dh, dw, ci) over the 3x3 patch; columns ordered (r, t, co), co fastest,
    where (r, t) is the output-pixel phase (oh = 2m+r, ow = 2q+t) of a stride-2/pad-1 deconv.
    """
    ci, co = w.shape[0], w.shape[1]
    wb = jnp.zeros((3, 3, ci, 2, 2, co), w.dtype)
    for r, taps_h in _PHASE_TAPS.items():
        for kh, dh in taps_h:
            for t, taps_w in _PHASE_TAPS.items():
                for kw, dw in taps_w:
                    wb = wb.at[dh + 1, dw + 1, :, r, t, :].set(w[:, :, kh, kw])
    return wb.reshape(9 * ci, 4 * co)


def phase_to_nhwc(y, n, h, w, co):
    """y: [N*H*W, 4*Co] with columns (r, t, co) -> NHWC [N, 2H, 2W, Co]."""
    g = y.reshape(n, h, w, 2, 2, co)
    return g.transpose(0, 1, 3, 2, 4, 5).reshape(n, 2 * h, 2 * w, co)


# --------------------------------------------------------------------- parameters
def init_params(key, size=32, nz=8, ngf=4):
    """Mirror Generator.__init__ layer construction; deterministic DCGAN-style init."""
    params = []
    keys = iter(jax.random.split(key, 16))

    def w(shape):
        return 0.02 * jax.random.normal(next(keys), shape, jnp.float32)

    s = size // 8
    co = ngf * s
    params.append((w((nz, co, K, K)), jnp.ones((co,), jnp.float32),
                   jnp.zeros((co,), jnp.float32)))
    s //= 2
    while s >= 1:
        ci, co = ngf * s * 2, ngf * s
        params.append((w((ci, co, K, K)), jnp.ones((co,), jnp.float32),
                       jnp.zeros((co,), jnp.float32)))
        s //= 2
    params.append((w((ngf, 3, K, K)),))   # final ConvTranspose2d (no BN, Sigmoid)
    return params


# ------------------------------------------------------------------- forward pass
def generator_forward(x_nchw, params):
    n = x_nchw.shape[0]

    # Layer 0: ConvTranspose2d(nz, C0, 4, 1, 0) on a 1x1 input == GEMM; cols (oh, ow, co).
    w0, g0, b0 = params[0]
    nz, co0 = w0.shape[0], w0.shape[1]
    w0mat = w0.transpose(0, 2, 3, 1).reshape(nz, K * K * co0)
    y = fused_layer(x_nchw.reshape(n, nz), w0mat, g0, b0, fold=K * K, act="bn_relu")
    a = y.reshape(n, K, K, co0)                                   # NHWC 4x4

    # Remaining layers: ConvTranspose2d(Ci, Co, 4, 2, 1) (+BN+ReLU, or +Sigmoid last).
    for layer in params[1:]:
        is_last = len(layer) == 1
        wl = layer[0]
        co = wl.shape[1]
        _, h, wdim, _ = a.shape
        cols = im2col3(a)                                         # [N*H*W, 9*Ci]
        wb = build_scatter_weight(wl)                             # [9*Ci, 4*Co]
        if is_last:
            y = fused_layer(cols, wb, fold=4, act="sigmoid")
        else:
            y = fused_layer(cols, wb, layer[1], layer[2], fold=4, act="bn_relu")
        a = phase_to_nhwc(y, n, h, wdim, co)

    return a.transpose(0, 3, 1, 2)                                # back to NCHW


# ------------------------------------------------------------ pure-JAX reference
def ref_convt(x_nchw, w, stride, pad):
    r = jnp.transpose(jnp.flip(w, axis=(2, 3)), (1, 0, 2, 3))     # [Co, Ci, kh, kw]
    q = w.shape[2] - 1 - pad
    return lax.conv_general_dilated(
        x_nchw, r, window_strides=(1, 1), padding=[(q, q), (q, q)],
        lhs_dilation=(stride, stride),
        dimension_numbers=("NCHW", "OIHW", "NCHW"))


def ref_bn_relu(x, g, b):
    mean = x.mean(axis=(0, 2, 3), keepdims=True)
    var = jnp.square(x - mean).mean(axis=(0, 2, 3), keepdims=True)
    y = (x - mean) / jnp.sqrt(var + EPS) * g.reshape(1, -1, 1, 1) + b.reshape(1, -1, 1, 1)
    return jnp.maximum(y, 0.0)


def ref_forward(x, params):
    w0, g0, b0 = params[0]
    a = ref_bn_relu(ref_convt(x, w0, stride=1, pad=0), g0, b0)
    for wl, gl, bl in params[1:-1]:
        a = ref_bn_relu(ref_convt(a, wl, stride=2, pad=1), gl, bl)
    a = ref_convt(a, params[-1][0], stride=2, pad=1)
    return jax.nn.sigmoid(a)


# -------------------------------------------------------------------------- main
if __name__ == "__main__":
    size, nz, ngf, batch = 32, 8, 4, 2
    key = jax.random.PRNGKey(0)
    kx, kp = jax.random.split(key)

    params = init_params(kp, size=size, nz=nz, ngf=ngf)
    x = jax.random.normal(kx, (batch, nz, 1, 1), jnp.float32)     # DCGAN latent, NCHW

    fwd = jax.jit(generator_forward)
    out = jax.block_until_ready(fwd(x, params))
    assert out.shape == (batch, 3, size, size), out.shape

    ref = jax.block_until_ready(ref_forward(x, params))
    max_err = float(jnp.max(jnp.abs(out - ref)))
    assert max_err < 2e-2, f"max abs err {max_err}"

    print("KERNEL_OK")
</pallas_src>

<mosaic_0001>
module attributes {stable_mosaic.version = 11 : i64} {
  func.func @fused_layer_kernel(%arg0: i32, %arg1: memref<2x8xf32, #tpu.memory_space<vmem>>, %arg2: memref<8x256xf32, #tpu.memory_space<vmem>>, %arg3: memref<256x256xf32, #tpu.memory_space<vmem>>, %arg4: memref<2x256xf32, #tpu.memory_space<vmem>>, %arg5: memref<2x256xf32, #tpu.memory_space<vmem>>) attributes {dimension_semantics = [#tpu.dimension_semantics<arbitrary>], iteration_bounds = array<i64: 1>, scalar_prefetch = 0 : i64, scratch_operands = 0 : i64, tpu.core_type = #tpu.core_type<tc>, window_params = [{pipeline_mode = #tpu.pipeline_mode<synchronous>, transform_indices = @transform_0, window_bounds = array<i64: 2, 8>}, {pipeline_mode = #tpu.pipeline_mode<synchronous>, transform_indices = @transform_1, window_bounds = array<i64: 8, 256>}, {pipeline_mode = #tpu.pipeline_mode<synchronous>, transform_indices = @transform_2, window_bounds = array<i64: 256, 256>}, {pipeline_mode = #tpu.pipeline_mode<synchronous>, transform_indices = @transform_3, window_bounds = array<i64: 2, 256>}, {pipeline_mode = #tpu.pipeline_mode<synchronous>, transform_indices = @transform_4, window_bounds = array<i64: 2, 256>}]} {
    %c0 = arith.constant 0 : index
    %c0_0 = arith.constant 0 : index
    %0 = vector.load %arg1[%c0, %c0_0] : memref<2x8xf32, #tpu.memory_space<vmem>>, vector<2x8xf32>
    %c0_1 = arith.constant 0 : index
    %c0_2 = arith.constant 0 : index
    %1 = vector.load %arg2[%c0_1, %c0_2] : memref<8x256xf32, #tpu.memory_space<vmem>>, vector<8x256xf32>
    %cst = arith.constant dense<0.000000e+00> : vector<2x256xf32>
    %2 = tpu.matmul %0, %1, %cst {dimension_numbers = #tpu.dot_dimension_numbers<[1], [0], [0], [1], [0, 0, 1, 1], [], []>} : vector<2x8xf32>, vector<8x256xf32>, vector<2x256xf32> -> vector<2x256xf32>
    %cst_3 = arith.constant dense<0.000000e+00> : vector<256xf32>
    %3 = vector.multi_reduction <add>, %2, %cst_3 [0] : vector<2x256xf32> to vector<256xf32>
    %4 = vector.shape_cast %3 : vector<256xf32> to vector<1x256xf32>
    %c0_4 = arith.constant 0 : index
    %c0_5 = arith.constant 0 : index
    %5 = vector.load %arg3[%c0_4, %c0_5] : memref<256x256xf32, #tpu.memory_space<vmem>>, vector<256x256xf32>
    %cst_6 = arith.constant dense<0.000000e+00> : vector<1x256xf32>
    %6 = tpu.matmul %4, %5, %cst_6 {dimension_numbers = #tpu.dot_dimension_numbers<[1], [0], [0], [1], [0, 0, 1, 1], [], []>} : vector<1x256xf32>, vector<256x256xf32>, vector<1x256xf32> -> vector<1x256xf32>
    %cst_7 = arith.constant 3.125000e-02 : f32
    %7 = vector.broadcast %cst_7 : f32 to vector<1x256xf32>
    %8 = arith.mulf %6, %7 : vector<1x256xf32>
    %9 = vector.broadcast %8 : vector<1x256xf32> to vector<2x256xf32>
    %10 = arith.subf %2, %9 : vector<2x256xf32>
    %11 = arith.mulf %10, %10 : vector<2x256xf32>
    %cst_8 = arith.constant dense<0.000000e+00> : vector<256xf32>
    %12 = vector.multi_reduction <add>, %11, %cst_8 [0] : vector<2x256xf32> to vector<256xf32>
    %13 = vector.shape_cast %12 : vector<256xf32> to vector<1x256xf32>
    %c0_9 = arith.constant 0 : index
    %c0_10 = arith.constant 0 : index
    %14 = vector.load %arg3[%c0_9, %c0_10] : memref<256x256xf32, #tpu.memory_space<vmem>>, vector<256x256xf32>
    %cst_11 = arith.constant dense<0.000000e+00> : vector<1x256xf32>
    %15 = tpu.matmul %13, %14, %cst_11 {dimension_numbers = #tpu.dot_dimension_numbers<[1], [0], [0], [1], [0, 0, 1, 1], [], []>} : vector<1x256xf32>, vector<256x256xf32>, vector<1x256xf32> -> vector<1x256xf32>
    %cst_12 = arith.constant 3.125000e-02 : f32
    %16 = vector.broadcast %cst_12 : f32 to vector<1x256xf32>
    %17 = arith.mulf %15, %16 : vector<1x256xf32>
    %cst_13 = arith.constant 9.99999974E-6 : f32
    %18 = vector.broadcast %cst_13 : f32 to vector<1x256xf32>
    %19 = arith.addf %17, %18 : vector<1x256xf32>
    %20 = math.rsqrt %19 : vector<1x256xf32>
    %21 = vector.broadcast %20 : vector<1x256xf32> to vector<2x256xf32>
    %22 = arith.mulf %10, %21 : vector<2x256xf32>
    %c0_14 = arith.constant 0 : index
    %c0_15 = arith.constant 0 : index
    %23 = vector.load %arg4[%c0_14, %c0_15] : memref<2x256xf32, #tpu.memory_space<vmem>>, vector<1x256xf32>
    %24 = vector.broadcast %23 : vector<1x256xf32> to vector<2x256xf32>
    %25 = arith.mulf %22, %24 : vector<2x256xf32>
    %c1 = arith.constant 1 : index
    %c0_16 = arith.constant 0 : index
    %26 = vector.load %arg4[%c1, %c0_16] : memref<2x256xf32, #tpu.memory_space<vmem>>, vector<1x256xf32>
    %27 = vector.broadcast %26 : vector<1x256xf32> to vector<2x256xf32>
    %28 = arith.addf %25, %27 : vector<2x256xf32>
    %cst_17 = arith.constant 0.000000e+00 : f32
    %29 = vector.broadcast %cst_17 : f32 to vector<2x256xf32>
    %30 = arith.maximumf %28, %29 : vector<2x256xf32>
    %c0_18 = arith.constant 0 : index
    %c0_19 = arith.constant 0 : index
    %31 = vector.load %arg5[%c0_18, %c0_19] : memref<2x256xf32, #tpu.memory_space<vmem>>, vector<2x256xf32>
    tpu.vector_store %arg5[%c0_18, %c0_19], %30 {strides = array<i32>} : memref<2x256xf32, #tpu.memory_space<vmem>>, vector<2x256xf32>,
    return
  }
  func.func @transform_0(%arg0: i32) -> (i32, i32) {
    %c0_i32 = arith.constant 0 : i32
    %c0_i32_0 = arith.constant 0 : i32
    %c0_i32_1 = arith.constant 0 : i32
    return %c0_i32, %c0_i32_0 : i32, i32
  }
  func.func @transform_1(%arg0: i32) -> (i32, i32) {
    %c0_i32 = arith.constant 0 : i32
    %c0_i32_0 = arith.constant 0 : i32
    %c0_i32_1 = arith.constant 0 : i32
    return %c0_i32, %c0_i32_0 : i32, i32
  }
  func.func @transform_2(%arg0: i32) -> (i32, i32) {
    %c0_i32 = arith.constant 0 : i32
    %c0_i32_0 = arith.constant 0 : i32
    %c0_i32_1 = arith.constant 0 : i32
    return %c0_i32, %c0_i32_0 : i32, i32
  }
  func.func @transform_3(%arg0: i32) -> (i32, i32) {
    %c0_i32 = arith.constant 0 : i32
    %c0_i32_0 = arith.constant 0 : i32
    %c0_i32_1 = arith.constant 0 : i32
    return %c0_i32, %c0_i32_0 : i32, i32
  }
  func.func @transform_4(%arg0: i32) -> (i32, i32) {
    %c0_i32 = arith.constant 0 : i32
    %c0_i32_0 = arith.constant 0 : i32
    %c0_i32_1 = arith.constant 0 : i32
    return %c0_i32, %c0_i32_0 : i32, i32
  }
}

module attributes {stable_mosaic.version = 11 : i64} {
  func.func @fused_layer_kernel(%arg0: i32, %arg1: memref<32x144xf32, #tpu.memory_space<vmem>>, %arg2: memref<144x32xf32, #tpu.memory_space<vmem>>, %arg3: memref<32x32xf32, #tpu.memory_space<vmem>>, %arg4: memref<2x32xf32, #tpu.memory_space<vmem>>, %arg5: memref<32x32xf32, #tpu.memory_space<vmem>>) attributes {dimension_semantics = [#tpu.dimension_semantics<arbitrary>], iteration_bounds = array<i64: 1>, scalar_prefetch = 0 : i64, scratch_operands = 0 : i64, tpu.core_type = #tpu.core_type<tc>, window_params = [{pipeline_mode = #tpu.pipeline_mode<synchronous>, transform_indices = @transform_0, window_bounds = array<i64: 32, 144>}, {pipeline_mode = #tpu.pipeline_mode<synchronous>, transform_indices = @transform_1, window_bounds = array<i64: 144, 32>}, {pipeline_mode = #tpu.pipeline_mode<synchronous>, transform_indices = @transform_2, window_bounds = array<i64: 32, 32>}, {pipeline_mode = #tpu.pipeline_mode<synchronous>, transform_indices = @transform_3, window_bounds = array<i64: 2, 32>}, {pipeline_mode = #tpu.pipeline_mode<synchronous>, transform_indices = @transform_4, window_bounds = array<i64: 32, 32>}]} {
    %c0 = arith.constant 0 : index
    %c0_0 = arith.constant 0 : index
    %0 = vector.load %arg1[%c0, %c0_0] : memref<32x144xf32, #tpu.memory_space<vmem>>, vector<32x144xf32>
    %c0_1 = arith.constant 0 : index
    %c0_2 = arith.constant 0 : index
    %1 = vector.load %arg2[%c0_1, %c0_2] : memref<144x32xf32, #tpu.memory_space<vmem>>, vector<144x32xf32>
    %cst = arith.constant dense<0.000000e+00> : vector<32x32xf32>
    %2 = tpu.matmul %0, %1, %cst {dimension_numbers = #tpu.dot_dimension_numbers<[1], [0], [0], [1], [0, 0, 1, 1], [], []>} : vector<32x144xf32>, vector<144x32xf32>, vector<32x32xf32> -> vector<32x32xf32>
    %cst_3 = arith.constant dense<0.000000e+00> : vector<32xf32>
    %3 = vector.multi_reduction <add>, %2, %cst_3 [0] : vector<32x32xf32> to vector<32xf32>
    %4 = vector.shape_cast %3 : vector<32xf32> to vector<1x32xf32>
    %c0_4 = arith.constant 0 : index
    %c0_5 = arith.constant 0 : index
    %5 = vector.load %arg3[%c0_4, %c0_5] : memref<32x32xf32, #tpu.memory_space<vmem>>, vector<32x32xf32>
    %cst_6 = arith.constant dense<0.000000e+00> : vector<1x32xf32>
    %6 = tpu.matmul %4, %5, %cst_6 {dimension_numbers = #tpu.dot_dimension_numbers<[1], [0], [0], [1], [0, 0, 1, 1], [], []>} : vector<1x32xf32>, vector<32x32xf32>, vector<1x32xf32> -> vector<1x32xf32>
    %cst_7 = arith.constant 7.812500e-03 : f32
    %7 = vector.broadcast %cst_7 : f32 to vector<1x32xf32>
    %8 = arith.mulf %6, %7 : vector<1x32xf32>
    %9 = vector.broadcast %8 : vector<1x32xf32> to vector<32x32xf32>
    %10 = arith.subf %2, %9 : vector<32x32xf32>
    %11 = arith.mulf %10, %10 : vector<32x32xf32>
    %cst_8 = arith.constant dense<0.000000e+00> : vector<32xf32>
    %12 = vector.multi_reduction <add>, %11, %cst_8 [0] : vector<32x32xf32> to vector<32xf32>
    %13 = vector.shape_cast %12 : vector<32xf32> to vector<1x32xf32>
    %c0_9 = arith.constant 0 : index
    %c0_10 = arith.constant 0 : index
    %14 = vector.load %arg3[%c0_9, %c0_10] : memref<32x32xf32, #tpu.memory_space<vmem>>, vector<32x32xf32>
    %cst_11 = arith.constant dense<0.000000e+00> : vector<1x32xf32>
    %15 = tpu.matmul %13, %14, %cst_11 {dimension_numbers = #tpu.dot_dimension_numbers<[1], [0], [0], [1], [0, 0, 1, 1], [], []>} : vector<1x32xf32>, vector<32x32xf32>, vector<1x32xf32> -> vector<1x32xf32>
    %cst_12 = arith.constant 7.812500e-03 : f32
    %16 = vector.broadcast %cst_12 : f32 to vector<1x32xf32>
    %17 = arith.mulf %15, %16 : vector<1x32xf32>
    %cst_13 = arith.constant 9.99999974E-6 : f32
    %18 = vector.broadcast %cst_13 : f32 to vector<1x32xf32>
    %19 = arith.addf %17, %18 : vector<1x32xf32>
    %20 = math.rsqrt %19 : vector<1x32xf32>
    %21 = vector.broadcast %20 : vector<1x32xf32> to vector<32x32xf32>
    %22 = arith.mulf %10, %21 : vector<32x32xf32>
    %c0_14 = arith.constant 0 : index
    %c0_15 = arith.constant 0 : index
    %23 = vector.load %arg4[%c0_14, %c0_15] : memref<2x32xf32, #tpu.memory_space<vmem>>, vector<1x32xf32>
    %24 = vector.broadcast %23 : vector<1x32xf32> to vector<32x32xf32>
    %25 = arith.mulf %22, %24 : vector<32x32xf32>
    %c1 = arith.constant 1 : index
    %c0_16 = arith.constant 0 : index
    %26 = vector.load %arg4[%c1, %c0_16] : memref<2x32xf32, #tpu.memory_space<vmem>>, vector<1x32xf32>
    %27 = vector.broadcast %26 : vector<1x32xf32> to vector<32x32xf32>
    %28 = arith.addf %25, %27 : vector<32x32xf32>
    %cst_17 = arith.constant 0.000000e+00 : f32
    %29 = vector.broadcast %cst_17 : f32 to vector<32x32xf32>
    %30 = arith.maximumf %28, %29 : vector<32x32xf32>
    %c0_18 = arith.constant 0 : index
    %c0_19 = arith.constant 0 : index
    %31 = vector.load %arg5[%c0_18, %c0_19] : memref<32x32xf32, #tpu.memory_space<vmem>>, vector<32x32xf32>
    tpu.vector_store %arg5[%c0_18, %c0_19], %30 {strides = array<i32>} : memref<32x32xf32, #tpu.memory_space<vmem>>, vector<32x32xf32>,
    return
  }
  func.func @transform_0(%arg0: i32) -> (i32, i32) {
    %c0_i32 = arith.constant 0 : i32
    %c0_i32_0 = arith.constant 0 : i32
    %c0_i32_1 = arith.constant 0 : i32
    return %c0_i32, %c0_i32_0 : i32, i32
  }
  func.func @transform_1(%arg0: i32) -> (i32, i32) {
    %c0_i32 = arith.constant 0 : i32
    %c0_i32_0 = arith.constant 0 : i32
    %c0_i32_1 = arith.constant 0 : i32
    return %c0_i32, %c0_i32_0 : i32, i32
  }
  func.func @transform_2(%arg0: i32) -> (i32, i32) {
    %c0_i32 = arith.constant 0 : i32
    %c0_i32_0 = arith.constant 0 : i32
    %c0_i32_1 = arith.constant 0 : i32
    return %c0_i32, %c0_i32_0 : i32, i32
  }
  func.func @transform_3(%arg0: i32) -> (i32, i32) {
    %c0_i32 = arith.constant 0 : i32
    %c0_i32_0 = arith.constant 0 : i32
    %c0_i32_1 = arith.constant 0 : i32
    return %c0_i32, %c0_i32_0 : i32, i32
  }
  func.func @transform_4(%arg0: i32) -> (i32, i32) {
    %c0_i32 = arith.constant 0 : i32
    %c0_i32_0 = arith.constant 0 : i32
    %c0_i32_1 = arith.constant 0 : i32
    return %c0_i32, %c0_i32_0 : i32, i32
  }
}

module attributes {stable_mosaic.version = 11 : i64} {
  func.func @fused_layer_kernel(%arg0: i32, %arg1: memref<128x72xf32, #tpu.memory_space<vmem>>, %arg2: memref<72x16xf32, #tpu.memory_space<vmem>>, %arg3: memref<16x16xf32, #tpu.memory_space<vmem>>, %arg4: memref<2x16xf32, #tpu.memory_space<vmem>>, %arg5: memref<128x16xf32, #tpu.memory_space<vmem>>) attributes {dimension_semantics = [#tpu.dimension_semantics<arbitrary>], iteration_bounds = array<i64: 1>, scalar_prefetch = 0 : i64, scratch_operands = 0 : i64, tpu.core_type = #tpu.core_type<tc>, window_params = [{pipeline_mode = #tpu.pipeline_mode<synchronous>, transform_indices = @transform_0, window_bounds = array<i64: 128, 72>}, {pipeline_mode = #tpu.pipeline_mode<synchronous>, transform_indices = @transform_1, window_bounds = array<i64: 72, 16>}, {pipeline_mode = #tpu.pipeline_mode<synchronous>, transform_indices = @transform_2, window_bounds = array<i64: 16, 16>}, {pipeline_mode = #tpu.pipeline_mode<synchronous>, transform_indices = @transform_3, window_bounds = array<i64: 2, 16>}, {pipeline_mode = #tpu.pipeline_mode<synchronous>, transform_indices = @transform_4, window_bounds = array<i64: 128, 16>}]} {
    %c0 = arith.constant 0 : index
    %c0_0 = arith.constant 0 : index
    %0 = vector.load %arg1[%c0, %c0_0] : memref<128x72xf32, #tpu.memory_space<vmem>>, vector<128x72xf32>
    %c0_1 = arith.constant 0 : index
    %c0_2 = arith.constant 0 : index
    %1 = vector.load %arg2[%c0_1, %c0_2] : memref<72x16xf32, #tpu.memory_space<vmem>>, vector<72x16xf32>
    %cst = arith.constant dense<0.000000e+00> : vector<128x16xf32>
    %2 = tpu.matmul %0, %1, %cst {dimension_numbers = #tpu.dot_dimension_numbers<[1], [0], [0], [1], [0, 0, 1, 1], [], []>} : vector<128x72xf32>, vector<72x16xf32>, vector<128x16xf32> -> vector<128x16xf32>
    %cst_3 = arith.constant dense<0.000000e+00> : vector<16xf32>
    %3 = vector.multi_reduction <add>, %2, %cst_3 [0] : vector<128x16xf32> to vector<16xf32>
    %4 = vector.shape_cast %3 : vector<16xf32> to vector<1x16xf32>
    %c0_4 = arith.constant 0 : index
    %c0_5 = arith.constant 0 : index
    %5 = vector.load %arg3[%c0_4, %c0_5] : memref<16x16xf32, #tpu.memory_space<vmem>>, vector<16x16xf32>
    %cst_6 = arith.constant dense<0.000000e+00> : vector<1x16xf32>
    %6 = tpu.matmul %4, %5, %cst_6 {dimension_numbers = #tpu.dot_dimension_numbers<[1], [0], [0], [1], [0, 0, 1, 1], [], []>} : vector<1x16xf32>, vector<16x16xf32>, vector<1x16xf32> -> vector<1x16xf32>
    %cst_7 = arith.constant 0.001953125 : f32
    %7 = vector.broadcast %cst_7 : f32 to vector<1x16xf32>
    %8 = arith.mulf %6, %7 : vector<1x16xf32>
    %9 = vector.broadcast %8 : vector<1x16xf32> to vector<128x16xf32>
    %10 = arith.subf %2, %9 : vector<128x16xf32>
    %11 = arith.mulf %10, %10 : vector<128x16xf32>
    %cst_8 = arith.constant dense<0.000000e+00> : vector<16xf32>
    %12 = vector.multi_reduction <add>, %11, %cst_8 [0] : vector<128x16xf32> to vector<16xf32>
    %13 = vector.shape_cast %12 : vector<16xf32> to vector<1x16xf32>
    %c0_9 = arith.constant 0 : index
    %c0_10 = arith.constant 0 : index
    %14 = vector.load %arg3[%c0_9, %c0_10] : memref<16x16xf32, #tpu.memory_space<vmem>>, vector<16x16xf32>
    %cst_11 = arith.constant dense<0.000000e+00> : vector<1x16xf32>
    %15 = tpu.matmul %13, %14, %cst_11 {dimension_numbers = #tpu.dot_dimension_numbers<[1], [0], [0], [1], [0, 0, 1, 1], [], []>} : vector<1x16xf32>, vector<16x16xf32>, vector<1x16xf32> -> vector<1x16xf32>
    %cst_12 = arith.constant 0.001953125 : f32
    %16 = vector.broadcast %cst_12 : f32 to vector<1x16xf32>
    %17 = arith.mulf %15, %16 : vector<1x16xf32>
    %cst_13 = arith.constant 9.99999974E-6 : f32
    %18 = vector.broadcast %cst_13 : f32 to vector<1x16xf32>
    %19 = arith.addf %17, %18 : vector<1x16xf32>
    %20 = math.rsqrt %19 : vector<1x16xf32>
    %21 = vector.broadcast %20 : vector<1x16xf32> to vector<128x16xf32>
    %22 = arith.mulf %10, %21 : vector<128x16xf32>
    %c0_14 = arith.constant 0 : index
    %c0_15 = arith.constant 0 : index
    %23 = vector.load %arg4[%c0_14, %c0_15] : memref<2x16xf32, #tpu.memory_space<vmem>>, vector<1x16xf32>
    %24 = vector.broadcast %23 : vector<1x16xf32> to vector<128x16xf32>
    %25 = arith.mulf %22, %24 : vector<128x16xf32>
    %c1 = arith.constant 1 : index
    %c0_16 = arith.constant 0 : index
    %26 = vector.load %arg4[%c1, %c0_16] : memref<2x16xf32, #tpu.memory_space<vmem>>, vector<1x16xf32>
    %27 = vector.broadcast %26 : vector<1x16xf32> to vector<128x16xf32>
    %28 = arith.addf %25, %27 : vector<128x16xf32>
    %cst_17 = arith.constant 0.000000e+00 : f32
    %29 = vector.broadcast %cst_17 : f32 to vector<128x16xf32>
    %30 = arith.maximumf %28, %29 : vector<128x16xf32>
    %c0_18 = arith.constant 0 : index
    %c0_19 = arith.constant 0 : index
    %31 = vector.load %arg5[%c0_18, %c0_19] : memref<128x16xf32, #tpu.memory_space<vmem>>, vector<128x16xf32>
    tpu.vector_store %arg5[%c0_18, %c0_19], %30 {strides = array<i32>} : memref<128x16xf32, #tpu.memory_space<vmem>>, vector<128x16xf32>,
    return
  }
  func.func @transform_0(%arg0: i32) -> (i32, i32) {
    %c0_i32 = arith.constant 0 : i32
    %c0_i32_0 = arith.constant 0 : i32
    %c0_i32_1 = arith.constant 0 : i32
    return %c0_i32, %c0_i32_0 : i32, i32
  }
  func.func @transform_1(%arg0: i32) -> (i32, i32) {
    %c0_i32 = arith.constant 0 : i32
    %c0_i32_0 = arith.constant 0 : i32
    %c0_i32_1 = arith.constant 0 : i32
    return %c0_i32, %c0_i32_0 : i32, i32
  }
  func.func @transform_2(%arg0: i32) -> (i32, i32) {
    %c0_i32 = arith.constant 0 : i32
    %c0_i32_0 = arith.constant 0 : i32
    %c0_i32_1 = arith.constant 0 : i32
    return %c0_i32, %c0_i32_0 : i32, i32
  }
  func.func @transform_3(%arg0: i32) -> (i32, i32) {
    %c0_i32 = arith.constant 0 : i32
    %c0_i32_0 = arith.constant 0 : i32
    %c0_i32_1 = arith.constant 0 : i32
    return %c0_i32, %c0_i32_0 : i32, i32
  }
  func.func @transform_4(%arg0: i32) -> (i32, i32) {
    %c0_i32 = arith.constant 0 : i32
    %c0_i32_0 = arith.constant 0 : i32
    %c0_i32_1 = arith.constant 0 : i32
    return %c0_i32, %c0_i32_0 : i32, i32
  }
}

module attributes {stable_mosaic.version = 11 : i64} {
  func.func @fused_layer_kernel(%arg0: i32, %arg1: memref<512x36xf32, #tpu.memory_space<vmem>>, %arg2: memref<36x12xf32, #tpu.memory_space<vmem>>, %arg3: memref<512x12xf32, #tpu.memory_space<vmem>>) attributes {dimension_semantics = [#tpu.dimension_semantics<arbitrary>], iteration_bounds = array<i64: 1>, scalar_prefetch = 0 : i64, scratch_operands = 0 : i64, tpu.core_type = #tpu.core_type<tc>, window_params = [{pipeline_mode = #tpu.pipeline_mode<synchronous>, transform_indices = @transform_0, window_bounds = array<i64: 512, 36>}, {pipeline_mode = #tpu.pipeline_mode<synchronous>, transform_indices = @transform_1, window_bounds = array<i64: 36, 12>}, {pipeline_mode = #tpu.pipeline_mode<synchronous>, transform_indices = @transform_2, window_bounds = array<i64: 512, 12>}]} {
    %c0 = arith.constant 0 : index
    %c0_0 = arith.constant 0 : index
    %0 = vector.load %arg1[%c0, %c0_0] : memref<512x36xf32, #tpu.memory_space<vmem>>, vector<512x36xf32>
    %c0_1 = arith.constant 0 : index
    %c0_2 = arith.constant 0 : index
    %1 = vector.load %arg2[%c0_1, %c0_2] : memref<36x12xf32, #tpu.memory_space<vmem>>, vector<36x12xf32>
    %cst = arith.constant dense<0.000000e+00> : vector<512x12xf32>
    %2 = tpu.matmul %0, %1, %cst {dimension_numbers = #tpu.dot_dimension_numbers<[1], [0], [0], [1], [0, 0, 1, 1], [], []>} : vector<512x36xf32>, vector<36x12xf32>, vector<512x12xf32> -> vector<512x12xf32>
    %3 = arith.negf %2 : vector<512x12xf32>
    %4 = math.exp %3 : vector<512x12xf32>
    %cst_3 = arith.constant 1.000000e+00 : f32
    %5 = vector.broadcast %cst_3 : f32 to vector<512x12xf32>
    %6 = arith.addf %5, %4 : vector<512x12xf32>
    %7 = arith.divf %5, %6 : vector<512x12xf32>
    %c0_4 = arith.constant 0 : index
    %c0_5 = arith.constant 0 : index
    %8 = vector.load %arg3[%c0_4, %c0_5] : memref<512x12xf32, #tpu.memory_space<vmem>>, vector<512x12xf32>
    tpu.vector_store %arg3[%c0_4, %c0_5], %7 {strides = array<i32>} : memref<512x12xf32, #tpu.memory_space<vmem>>, vector<512x12xf32>,
    return
  }
  func.func @transform_0(%arg0: i32) -> (i32, i32) {
    %c0_i32 = arith.constant 0 : i32
    %c0_i32_0 = arith.constant 0 : i32
    %c0_i32_1 = arith.constant 0 : i32
    return %c0_i32, %c0_i32_0 : i32, i32
  }
  func.func @transform_1(%arg0: i32) -> (i32, i32) {
    %c0_i32 = arith.constant 0 : i32
    %c0_i32_0 = arith.constant 0 : i32
    %c0_i32_1 = arith.constant 0 : i32
    return %c0_i32, %c0_i32_0 : i32, i32
  }
  func.func @transform_2(%arg0: i32) -> (i32, i32) {
    %c0_i32 = arith.constant 0 : i32
    %c0_i32_0 = arith.constant 0 : i32
    %c0_i32_1 = arith.constant 0 : i32
    return %c0_i32, %c0_i32_0 : i32, i32
  }
}

</mosaic_0001>

<llo_original>
// kernel: tile.33
$region0: #{tile.33}
  #allocation2 [shape = 's32[1]{0}', space=sflag, size = 0x4, scoped, tag = 'scoped memory for tile.33']
  %s0 = inlined_call_operand.hbm [shape: f32[16], index: 0, kind: input, shape index: {}]
  %s1 = inlined_call_operand.vmem [shape: f32[16,16], index: 1, kind: output, shape index: {}]
  $region1: #{tile.33} parent=0
    #allocation0 [shape = 'u8[512]{0}', space=vmem, size = 0x400, scoped, tag = 'operand span for operand 0']
    #allocation1 [shape = 's32[1]{0}', space=sflag, size = 0x4, scoped, tag = 'scoped memory for tile.33']
    %2 = vsyncpa [#allocation1], 0
    // Predicated region
    $region2: #{tile.33} parent=1 // pred_check
      _
    $region3: #{tile.33} parent=1 // pred_check_branch
      %4 = sbr.rel (0) target = $region5
    $region4: #{tile.33} parent=1 // pred_region
      %s6 = ssub.s32 16, 16
      %7 = vsyncadd [#allocation1], %s6
      %s9 = sshll.u32 [#allocation0], 4
      %s10 = int_to_ptr.vmem [resolvable:$true] %s9
      %12 = dma.hbm_to_vmem [thread:$0]  %s0, 16, %s10, [#allocation1]
    $region5: #{tile.33} parent=1 // pred_fallthru
      _
    // Predicated region
    $region6: #{tile.33} parent=1 // pred_check
      _
    $region7: #{tile.33} parent=1 // pred_check_branch
      %14 = sbr.rel (0) target = $region9
    $region8: #{tile.33} parent=1 // pred_region
      %15 = dma.done [#allocation1], 16
    $region9: #{tile.33} parent=1 // pred_fallthru
      _
    %v16 = vld [vmem:[#allocation0] ss:$0 sm:$0xff]
    %17 = vst [vmem:[%s1] sm:$0xff] %v16
    %s18 = scalar_lea.vmem %s1, 8
    %19 = vst [vmem:[%s18] sm:$0xff] %v16
    %20 = vsyncpa [#allocation1], 1

// kernel: tile.38
$region0: #{tile.38}
  %s0 = inlined_call_operand.vmem [shape: f32[16,16], index: 0, kind: input, shape index: {}]
  %s1 = inlined_call_operand.vmem [shape: f32[1,256], index: 1, kind: output, shape index: {}]
  $region1: #{tile.38} parent=0
    #allocation0 [shape = 'u8[8192]{0}', space=vmem, size = 0x2000, scoped, tag = 'scoped mem for output reshape']
    %s2 = smov 3
    %v3 = vld [vmem:[%s0] ss:$8 sm:%s2]
    %vm4 = vcmask 130048
    %5 = vst.msk [vmem:[#allocation0] ss:$8 sm:$0x3] %vm4, %v3
    %s6 = scalar_lea.vmem %s0, 7
    %s7 = smov 3
    %v8 = vld [vmem:[%s6] ss:$8 sm:%s7]
    %9 = vrot.lane.b32.xlu0 %v8, 112
    %v10 = vpop.permute.xlu0 %9
    %vm11 = vcmask 1048448
    %12 = vst.msk [vmem:[#allocation0] ss:$8 sm:$0x3] %vm11, %v10
    %s13 = scalar_lea.vmem %s0, 6
    %s14 = smov 3
    %v15 = vld [vmem:[%s13] ss:$8 sm:%s14]
    %16 = vrot.lane.b32.xlu0 %v15, 96
    %v17 = vpop.permute.xlu0 %16
    %vm18 = vcmask 917248
    %19 = vst.msk [vmem:[#allocation0] ss:$8 sm:$0x3] %vm18, %v17
    %s20 = scalar_lea.vmem %s0, 5
    %s21 = smov 3
    %v22 = vld [vmem:[%s20] ss:$8 sm:%s21]
    %23 = vrot.lane.b32.xlu0 %v22, 80
    %v24 = vpop.permute.xlu0 %23
    %vm25 = vcmask 786048
    %26 = vst.msk [vmem:[#allocation0] ss:$8 sm:$0x3] %vm25, %v24
    %s27 = scalar_lea.vmem %s0, 4
    %s28 = smov 3
    %v29 = vld [vmem:[%s27] ss:$8 sm:%s28]
    %30 = vrot.lane.b32.xlu0 %v29, 64
    %v31 = vpop.permute.xlu0 %30
    %vm32 = vcmask 654848
    %33 = vst.msk [vmem:[#allocation0] ss:$8 sm:$0x3] %vm32, %v31
    %s34 = scalar_lea.vmem %s0, 3
    %s35 = smov 3
    %v36 = vld [vmem:[%s34] ss:$8 sm:%s35]
    %37 = vrot.lane.b32.xlu0 %v36, 48
    %v38 = vpop.permute.xlu0 %37
    %vm39 = vcmask 523648
    %40 = vst.msk [vmem:[#allocation0] ss:$8 sm:$0x3] %vm39, %v38
    %s41 = scalar_lea.vmem %s0, 2
    %s42 = smov 3
    %v43 = vld [vmem:[%s41] ss:$8 sm:%s42]
    %44 = vrot.lane.b32.xlu0 %v43, 32
    %v45 = vpop.permute.xlu0 %44
    %vm46 = vcmask 392448
    %47 = vst.msk [vmem:[#allocation0] ss:$8 sm:$0x3] %vm46, %v45
    %s48 = scalar_lea.vmem %s0, 1
    %s49 = smov 3
    %v50 = vld [vmem:[%s48] ss:$8 sm:%s49]
    %51 = vrot.lane.b32.xlu0 %v50, 16
    %v52 = vpop.permute.xlu0 %51
    %vm53 = vcmask 261248
    %54 = vst.msk [vmem:[#allocation0] ss:$8 sm:$0x3] %vm53, %v52
    %s56 = sshllo.u32 0, 1
    %v58 = vld [vmem:[#allocation0] sm:%s56]
    %s59 = sshllo.u32 0, 1
    %60 = vst [vmem:[%s1] sm:%s59] %v58
    %s61 = scalar_lea.vmem [#allocation0], 8
    %v62 = vld [vmem:[%s61] sm:%s56]
    %s63 = sshllo.u32 0, 1
    %s64 = scalar_lea.vmem %s1, 1
    %65 = vst [vmem:[%s64] sm:%s63] %v62

// kernel: tile.43
$region0: #{tile.43}
  #allocation0 [shape = 's32[1]{0}', space=sflag, size = 0x4, scoped, tag = 'scoped memory for tile.43']
  %s0 = inlined_call_operand.vmem [shape: f32[8], index: 0, kind: input, shape index: {}]
  %s1 = inlined_call_operand.vmem [shape: f32[4,8], index: 1, kind: output, shape index: {}]
  // Predicated region
  $region2: #{tile.43} parent=0 // pred_check
    _
  $region3: #{tile.43} parent=0 // pred_check_branch
    %3 = sbr.rel (0) target = $region5
  $region4: #{tile.43} parent=0 // pred_region
    _
  $region5: #{tile.43} parent=0 // pred_fallthru
    _
  %v4 = vld [vmem:[%s0] ss:$0 sm:$0xff]
  %5 = vst [vmem:[%s1] sm:$0xf] %v4

// kernel: tile.48
$region0: #{tile.48}
  %s0 = inlined_call_operand.vmem [shape: f32[4,8], index: 0, kind: input, shape index: {}]
  %s1 = inlined_call_operand.vmem [shape: f32[1,32], index: 1, kind: output, shape index: {}]
  $region1: #{tile.48} parent=0
    #allocation0 [shape = 'u8[4096]{0}', space=vmem, size = 0x1000, scoped, tag = 'scoped mem for output reshape']
    #allocation1 [shape = 'u8[4096]{0}', space=vmem, size = 0x1000, scoped, tag = 'scoped mem for input reshape']
    %s3 = sshllo.u32 0, 4
    %v4 = vld [vmem:[%s0] sm:%s3]
    %5 = vst [vmem:[#allocation1] sm:%s3] %v4
    %v6 = vld [vmem:[#allocation1] sm:$0x1]
    %vm7 = vcmask 64512
    %8 = vst.msk [vmem:[#allocation0] sm:$0x1] %vm7, %v6
    %s9 = scalar_lea.vmem [#allocation1], 3
    %v10 = vld [vmem:[%s9] sm:$0x1]
    %11 = vrot.lane.b32.xlu0 %v10, 24
    %v12 = vpop.permute.xlu0 %11
    %vm13 = vcmask 261312
    %14 = vst.msk [vmem:[#allocation0] sm:$0x1] %vm13, %v12
    %s15 = scalar_lea.vmem [#allocation1], 2
    %v16 = vld [vmem:[%s15] sm:$0x1]
    %17 = vrot.lane.b32.xlu0 %v16, 16
    %v18 = vpop.permute.xlu0 %17
    %vm19 = vcmask 195712
    %20 = vst.msk [vmem:[#allocation0] sm:$0x1] %vm19, %v18
    %s21 = scalar_lea.vmem [#allocation1], 1
    %v22 = vld [vmem:[%s21] sm:$0x1]
    %23 = vrot.lane.b32.xlu0 %v22, 8
    %v24 = vpop.permute.xlu0 %23
    %vm25 = vcmask 130112
    %26 = vst.msk [vmem:[#allocation0] sm:$0x1] %vm25, %v24
    %s28 = sshllo.u32 0, 1
    %v30 = vld [vmem:[#allocation0] sm:%s28]
    %s31 = sshllo.u32 0, 1
    %32 = vst [vmem:[%s1] sm:%s31] %v30

// kernel: generator_forward.4
$region0: #{generator_forward.4}
  #allocation0 [shape = 'u32[]', space=smem, size = 0x4, offset = 0x4, fixed_abs, tag = 'smem constant byte address 0x4 - core index']
  #allocation1 [shape = 'u32[144,128]{1,0:T(1,128)}', space=vmem, size = 0x12000, scoped, tag = 'internal scratch']
  %s0 = inlined_call_operand.hbm [shape: f32[2,8], index: 0, kind: input, shape index: {}]
  %s1 = inlined_call_operand.vmem [shape: f32[8,256], index: 1, kind: input, shape index: {}]
  %s2 = inlined_call_operand.vmem [shape: f32[256,256], index: 2, kind: input, shape index: {}]
  %s3 = inlined_call_operand.vmem [shape: f32[2,256], index: 3, kind: input, shape index: {}]
  %s4 = inlined_call_operand.vmem [shape: f32[2,256], index: 4, kind: output, shape index: {}]
  %s5 = sld [smem:[#allocation0]]
  $region30: #{generator_forward.4} parent=0
    _
  %s7 = ssub.s32 1, %s5
  %s8 = scalar_select 0, %s7, %s5
  $region1: #{generator_forward.4} parent=0
    #allocation2 [shape = 'u8[1024]{0}', space=vmem, size = 0x400, scoped, tag = 'input window, operand 0, single buffered']
    #allocation3 [shape = 's32[1]{0}', space=sflag, size = 0x4, scoped, tag = 'scoped memory for generator_forward.4']
    %9 = vsyncpa [#allocation3], 0
    // Predicated region
    $region2: #{generator_forward.4} parent=1 // pred_check
      _
    $region3: #{generator_forward.4} parent=1 // pred_check_branch
      %11 = sbr.rel (0) target = $region5
    $region4: #{generator_forward.4} parent=1 // pred_region
      %s13 = ssub.s32 32, 32
      %14 = vsyncadd [#allocation3], %s13
      %s16 = sshll.u32 [#allocation2], 4
      %s17 = int_to_ptr.vmem [resolvable:$true] %s16
      %19 = dma.hbm_to_vmem [thread:$0]  %s0, 32, %s17, [#allocation3]
    $region5: #{generator_forward.4} parent=1 // pred_fallthru
      _
    // Predicated region
    $region6: #{generator_forward.4} parent=1 // pred_check
      _
    $region7: #{generator_forward.4} parent=1 // pred_check_branch
      %21 = sbr.rel (0) target = $region9
    $region8: #{generator_forward.4} parent=1 // pred_region
      _
    $region9: #{generator_forward.4} parent=1 // pred_fallthru
      _
    // Predicated region
    $region10: #{generator_forward.4} parent=1 // pred_check
      _
    $region11: #{generator_forward.4} parent=1 // pred_check_branch
      %23 = sbr.rel (0) target = $region13
    $region12: #{generator_forward.4} parent=1 // pred_region
      _
    $region13: #{generator_forward.4} parent=1 // pred_fallthru
      _
    // Predicated region
    $region14: #{generator_forward.4} parent=1 // pred_check
      _
    $region15: #{generator_forward.4} parent=1 // pred_check_branch
      %25 = sbr.rel (0) target = $region17
    $region16: #{generator_forward.4} parent=1 // pred_region
      _
    $region17: #{generator_forward.4} parent=1 // pred_fallthru
      _
    // Predicated region
    $region18: #{generator_forward.4} parent=1 // pred_check
      _
    $region19: #{generator_forward.4} parent=1 // pred_check_branch
      %27 = sbr.rel (0) target = $region21
    $region20: #{generator_forward.4} parent=1 // pred_region
      %28 = dma.done [#allocation3], 32
    $region21: #{generator_forward.4} parent=1 // pred_fallthru
      _
    %v29 = vld [vmem:[#allocation2] sm:$0x3]
    %v30 = vld [vmem:[%s1] sm:$0xff]
    %v31 = vld [vmem:[%s1 + $0x8] sm:$0xff]
    %vm32 = vcmask 64512
    %v34 = vsel %vm32, %v29, 0
    %36 = vmatprep.subr.mxu0 %v31
    %37 = vmatpush1.msra.mxu0 %v30
    %38 = vmatprep.subr.mxu0 0.0
    %39 = vmatpush1.msra.mxu0 0.0
    %40 = vmatprep.subr.mxu0 0.0
    %41 = vmatpush1.msra.mxu0 0.0
    %42 = vmatprep.subr.mxu0 0.0
    %43 = vmatpush1.msra.mxu0 0.0
    %44 = vmatprep.subr.mxu0 0.0
    %45 = vmatpush1.msra.mxu0 0.0
    %46 = vmatprep.subr.mxu0 0.0
    %47 = vmatpush1.msra.mxu0 0.0
    %48 = vmatprep.subr.mxu0 0.0
    %49 = vmatpush1.msra.mxu0 0.0
    %50 = vmatprep.subr.mxu0 0.0
    %51 = vmatpush1.msra.mxu0 0.0
    %52 = vmatprep.subr.mxu0 0.0
    %53 = vmatpush1.msra.mxu0 0.0
    %54 = vmatprep.subr.mxu0 0.0
    %55 = vmatpush1.msra.mxu0 0.0
    %56 = vmatprep.subr.mxu0 0.0
    %57 = vmatpush1.msra.mxu0 0.0
    %58 = vmatprep.subr.mxu0 0.0
    %59 = vmatpush1.msra.mxu0 0.0
    %60 = vmatprep.subr.mxu0 0.0
    %61 = vmatpush1.msra.mxu0 0.0
    %62 = vmatprep.subr.mxu0 0.0
    %63 = vmatpush1.msra.mxu0 0.0
    %64 = vmatprep.subr.mxu0 0.0
    %65 = vmatpush1.msra.mxu0 0.0
    %66 = vmatprep.subr.mxu0 0.0
    %67 = vmatpush1.msra.mxu0 0.0
    %68 = vmatprep.subr.mxu0 0.0
    %69 = vmatpush1.msra.mxu0 0.0
    %70 = vmatprep.subr.mxu0 0.0
    %71 = vmatpush1.msra.mxu0 0.0
    %72 = vmatprep.subr.mxu0 0.0
    %73 = vmatpush1.msra.mxu0 0.0
    %74 = vmatprep.subr.mxu0 0.0
    %75 = vmatpush1.msra.mxu0 0.0
    %76 = vmatprep.subr.mxu0 0.0
    %77 = vmatpush1.msra.mxu0 0.0
    %78 = vmatprep.subr.mxu0 0.0
    %79 = vmatpush1.msra.mxu0 0.0
    %80 = vmatprep.subr.mxu0 0.0
    %81 = vmatpush1.msra.mxu0 0.0
    %82 = vmatprep.subr.mxu0 0.0
    %83 = vmatpush1.msra.mxu0 0.0
    %84 = vmatprep.subr.mxu0 0.0
    %85 = vmatpush1.msra.mxu0 0.0
    %86 = vmatprep.subr.mxu0 0.0
    %87 = vmatpush1.msra.mxu0 0.0
    %88 = vmatprep.subr.mxu0 0.0
    %89 = vmatpush1.msra.mxu0 0.0
    %90 = vmatprep.subr.mxu0 0.0
    %91 = vmatpush1.msra.mxu0 0.0
    %92 = vmatprep.subr.mxu0 0.0
    %93 = vmatpush1.msra.mxu0 0.0
    %94 = vmatprep.subr.mxu0 0.0
    %95 = vmatpush1.msra.mxu0 0.0
    %96 = vmatprep.subr.mxu0 0.0
    %97 = vmatpush1.msra.mxu0 0.0
    %98 = vmatprep.subr.mxu0 0.0
    %99 = vmatpush1.msra.mxu0 0.0
    %100 = vmatprep.mubr.f32.mxu0 0.0
    %101 = vmatmul.mubr.f32.gmra.mrb[0].mxu0 %v34
    %v102 = vpop.f32.mrb[0].mxu0
    %v103 = vadd.f32 0.0, %v102
    %v104 = vpop.f32.mrb[0].mxu0
    %v105 = vadd.f32 0.0, %v104
    %106 = vdwg.mxu0
    %vm107 = vcmask 1041408
    %v108 = vsel %vm107, %v103, 0.0
    %v109 = vrot.slane %v108, 4
    %v110 = vadd.f32 %v108, %v109
    %v111 = vrot.slane %v110, 2
    %v112 = vadd.f32 %v110, %v111
    %v113 = vrot.slane %v112, 1
    %v114 = vadd.f32 %v112, %v113
    %v115 = vsel %vm107, %v105, 0.0
    %v116 = vrot.slane %v115, 4
    %v117 = vadd.f32 %v115, %v116
    %v118 = vrot.slane %v117, 2
    %v119 = vadd.f32 %v117, %v118
    %v120 = vrot.slane %v119, 1
    %v121 = vadd.f32 %v119, %v120
    %v122 = vld [vmem:[%s2] sm:$0xff]
    %v123 = vld [vmem:[%s2 + $0x8] sm:$0xff]
    %v124 = vld [vmem:[%s2 + $0x10] sm:$0xff]
    %v125 = vld [vmem:[%s2 + $0x18] sm:$0xff]
    %v126 = vld [vmem:[%s2 + $0x20] sm:$0xff]
    %v127 = vld [vmem:[%s2 + $0x28] sm:$0xff]
    %v128 = vld [vmem:[%s2 + $0x30] sm:$0xff]
    %v129 = vld [vmem:[%s2 + $0x38] sm:$0xff]
    %v130 = vld [vmem:[%s2 + $0x40] sm:$0xff]
    %v131 = vld [vmem:[%s2 + $0x48] sm:$0xff]
    %v132 = vld [vmem:[%s2 + $0x50] sm:$0xff]
    %v133 = vld [vmem:[%s2 + $0x58] sm:$0xff]
    %v134 = vld [vmem:[%s2 + $0x60] sm:$0xff]
    %v135 = vld [vmem:[%s2 + $0x68] sm:$0xff]
    %v136 = vld [vmem:[%s2 + $0x70] sm:$0xff]
    %v137 = vld [vmem:[%s2 + $0x78] sm:$0xff]
    %v138 = vld [vmem:[%s2 + $0x80] sm:$0xff]
    %v139 = vld [vmem:[%s2 + $0x88] sm:$0xff]
    %v140 = vld [vmem:[%s2 + $0x90] sm:$0xff]
    %v141 = vld [vmem:[%s2 + $0x98] sm:$0xff]
    %v142 = vld [vmem:[%s2 + $0xa0] sm:$0xff]
    %v143 = vld [vmem:[%s2 + $0xa8] sm:$0xff]
    %v144 = vld [vmem:[%s2 + $0xb0] sm:$0xff]
    %v145 = vld [vmem:[%s2 + $0xb8] sm:$0xff]
    %v146 = vld [vmem:[%s2 + $0xc0] sm:$0xff]
    %v147 = vld [vmem:[%s2 + $0xc8] sm:$0xff]
    %v148 = vld [vmem:[%s2 + $0xd0] sm:$0xff]
    %v149 = vld [vmem:[%s2 + $0xd8] sm:$0xff]
    %v150 = vld [vmem:[%s2 + $0xe0] sm:$0xff]
    %v151 = vld [vmem:[%s2 + $0xe8] sm:$0xff]
    %v152 = vld [vmem:[%s2 + $0xf0] sm:$0xff]
    %v153 = vld [vmem:[%s2 + $0xf8] sm:$0xff]
    %v154 = vld [vmem:[%s2 + $0x100] sm:$0xff]
    %v155 = vld [vmem:[%s2 + $0x108] sm:$0xff]
    %v156 = vld [vmem:[%s2 + $0x110] sm:$0xff]
    %v157 = vld [vmem:[%s2 + $0x118] sm:$0xff]
    %v158 = vld [vmem:[%s2 + $0x120] sm:$0xff]
    %v159 = vld [vmem:[%s2 + $0x128] sm:$0xff]
    %v160 = vld [vmem:[%s2 + $0x130] sm:$0xff]
    %v161 = vld [vmem:[%s2 + $0x138] sm:$0xff]
    %v162 = vld [vmem:[%s2 + $0x140] sm:$0xff]
    %v163 = vld [vmem:[%s2 + $0x148] sm:$0xff]
    %v164 = vld [vmem:[%s2 + $0x150] sm:$0xff]
    %v165 = vld [vmem:[%s2 + $0x158] sm:$0xff]
    %v166 = vld [vmem:[%s2 + $0x160] sm:$0xff]
    %v167 = vld [vmem:[%s2 + $0x168] sm:$0xff]
    %v168 = vld [vmem:[%s2 + $0x170] sm:$0xff]
    %v169 = vld [vmem:[%s2 + $0x178] sm:$0xff]
    %v170 = vld [vmem:[%s2 + $0x180] sm:$0xff]
    %v171 = vld [vmem:[%s2 + $0x188] sm:$0xff]
    %v172 = vld [vmem:[%s2 + $0x190] sm:$0xff]
    %v173 = vld [vmem:[%s2 + $0x198] sm:$0xff]
    %v174 = vld [vmem:[%s2 + $0x1a0] sm:$0xff]
    %v175 = vld [vmem:[%s2 + $0x1a8] sm:$0xff]
    %v176 = vld [vmem:[%s2 + $0x1b0] sm:$0xff]
    %v177 = vld [vmem:[%s2 + $0x1b8] sm:$0xff]
    %v178 = vld [vmem:[%s2 + $0x1c0] sm:$0xff]
    %v179 = vld [vmem:[%s2 + $0x1c8] sm:$0xff]
    %v180 = vld [vmem:[%s2 + $0x1d0] sm:$0xff]
    %v181 = vld [vmem:[%s2 + $0x1d8] sm:$0xff]
    %v182 = vld [vmem:[%s2 + $0x1e0] sm:$0xff]
    %v183 = vld [vmem:[%s2 + $0x1e8] sm:$0xff]
    %v184 = vld [vmem:[%s2 + $0x1f0] sm:$0xff]
    %v185 = vld [vmem:[%s2 + $0x1f8] sm:$0xff]
    %186 = vmatprep.subr.mxu0 %v123
    %187 = vmatpush1.msra.mxu0 %v122
    %188 = vmatprep.subr.mxu0 %v125
    %189 = vmatpush1.msra.mxu0 %v124
    %190 = vmatprep.subr.mxu0 %v127
    %191 = vmatpush1.msra.mxu0 %v126
    %192 = vmatprep.subr.mxu0 %v129
    %193 = vmatpush1.msra.mxu0 %v128
    %194 = vmatprep.subr.mxu0 %v131
    %195 = vmatpush1.msra.mxu0 %v130
    %196 = vmatprep.subr.mxu0 %v133
    %197 = vmatpush1.msra.mxu0 %v132
    %198 = vmatprep.subr.mxu0 %v135
    %199 = vmatpush1.msra.mxu0 %v134
    %200 = vmatprep.subr.mxu0 %v137
    %201 = vmatpush1.msra.mxu0 %v136
    %202 = vmatprep.subr.mxu0 %v139
    %203 = vmatpush1.msra.mxu0 %v138
    %204 = vmatprep.subr.mxu0 %v141
    %205 = vmatpush1.msra.mxu0 %v140
    %206 = vmatprep.subr.mxu0 %v143
    %207 = vmatpush1.msra.mxu0 %v142
    %208 = vmatprep.subr.mxu0 %v145
    %209 = vmatpush1.msra.mxu0 %v144
    %210 = vmatprep.subr.mxu0 %v147
    %211 = vmatpush1.msra.mxu0 %v146
    %212 = vmatprep.subr.mxu0 %v149
    %213 = vmatpush1.msra.mxu0 %v148
    %214 = vmatprep.subr.mxu0 %v151
    %215 = vmatpush1.msra.mxu0 %v150
    %216 = vmatprep.subr.mxu0 %v153
    %217 = vmatpush1.msra.mxu0 %v152
    %218 = vmatprep.subr.mxu0 %v155
    %219 = vmatpush1.msra.mxu0 %v154
    %220 = vmatprep.subr.mxu0 %v157
    %221 = vmatpush1.msra.mxu0 %v156
    %222 = vmatprep.subr.mxu0 %v159
    %223 = vmatpush1.msra.mxu0 %v158
    %224 = vmatprep.subr.mxu0 %v161
    %225 = vmatpush1.msra.mxu0 %v160
    %226 = vmatprep.subr.mxu0 %v163
    %227 = vmatpush1.msra.mxu0 %v162
    %228 = vmatprep.subr.mxu0 %v165
    %229 = vmatpush1.msra.mxu0 %v164
    %230 = vmatprep.subr.mxu0 %v167
    %231 = vmatpush1.msra.mxu0 %v166
    %232 = vmatprep.subr.mxu0 %v169
    %233 = vmatpush1.msra.mxu0 %v168
    %234 = vmatprep.subr.mxu0 %v171
    %235 = vmatpush1.msra.mxu0 %v170
    %236 = vmatprep.subr.mxu0 %v173
    %237 = vmatpush1.msra.mxu0 %v172
    %238 = vmatprep.subr.mxu0 %v175
    %239 = vmatpush1.msra.mxu0 %v174
    %240 = vmatprep.subr.mxu0 %v177
    %241 = vmatpush1.msra.mxu0 %v176
    %242 = vmatprep.subr.mxu0 %v179
    %243 = vmatpush1.msra.mxu0 %v178
    %244 = vmatprep.subr.mxu0 %v181
    %245 = vmatpush1.msra.mxu0 %v180
    %246 = vmatprep.subr.mxu0 %v183
    %247 = vmatpush1.msra.mxu0 %v182
    %248 = vmatprep.subr.mxu0 %v185
    %249 = vmatpush1.msra.mxu0 %v184
    %250 = vmatprep.mubr.f32.mxu0 %v121
    %251 = vmatmul.mubr.f32.gmra.mrb[0].mxu0 %v114
    %v252 = vpop.f32.mrb[0].mxu0
    %v253 = vadd.f32 0.0, %v252
    %v254 = vpop.f32.mrb[0].mxu0
    %v255 = vadd.f32 0.0, %v254
    %256 = vdwg.mxu0
    %v257 = vmul.f32 %v253, 0.03125
    %v258 = vmul.f32 %v255, 0.03125
    %v259 = vlaneseq
    %v260 = vshrl.u32 %v259, 7
    %v261 = vsub.s32 0, %v260
    %v262 = vrot.slane %v257, %v261
    %v263 = vlaneseq
    %v264 = vshrl.u32 %v263, 7
    %v265 = vsub.s32 0, %v264
    %v266 = vrot.slane %v258, %v265
    %v267 = vsub.f32 %v103, %v262
    %v268 = vsub.f32 %v105, %v266
    %v269 = vmul.f32 %v267, %v267
    %v270 = vmul.f32 %v268, %v268
    %v271 = vsel %vm107, %v269, 0.0
    %v272 = vrot.slane %v271, 4
    %v273 = vadd.f32 %v271, %v272
    %v274 = vrot.slane %v273, 2
    %v275 = vadd.f32 %v273, %v274
    %v276 = vrot.slane %v275, 1
    %v277 = vadd.f32 %v275, %v276
    %v278 = vsel %vm107, %v270, 0.0
    %v279 = vrot.slane %v278, 4
    %v280 = vadd.f32 %v278, %v279
    %v281 = vrot.slane %v280, 2
    %v282 = vadd.f32 %v280, %v281
    %v283 = vrot.slane %v282, 1
    %v284 = vadd.f32 %v282, %v283
    %285 = vmatprep.subr.mxu0 %v123
    %286 = vmatpush1.msra.mxu0 %v122
    %287 = vmatprep.subr.mxu0 %v125
    %288 = vmatpush1.msra.mxu0 %v124
    %289 = vmatprep.subr.mxu0 %v127
    %290 = vmatpush1.msra.mxu0 %v126
    %291 = vmatprep.subr.mxu0 %v129
    %292 = vmatpush1.msra.mxu0 %v128
    %293 = vmatprep.subr.mxu0 %v131
    %294 = vmatpush1.msra.mxu0 %v130
    %295 = vmatprep.subr.mxu0 %v133
    %296 = vmatpush1.msra.mxu0 %v132
    %297 = vmatprep.subr.mxu0 %v135
    %298 = vmatpush1.msra.mxu0 %v134
    %299 = vmatprep.subr.mxu0 %v137
    %300 = vmatpush1.msra.mxu0 %v136
    %301 = vmatprep.subr.mxu0 %v139
    %302 = vmatpush1.msra.mxu0 %v138
    %303 = vmatprep.subr.mxu0 %v141
    %304 = vmatpush1.msra.mxu0 %v140
    %305 = vmatprep.subr.mxu0 %v143
    %306 = vmatpush1.msra.mxu0 %v142
    %307 = vmatprep.subr.mxu0 %v145
    %308 = vmatpush1.msra.mxu0 %v144
    %309 = vmatprep.subr.mxu0 %v147
    %310 = vmatpush1.msra.mxu0 %v146
    %311 = vmatprep.subr.mxu0 %v149
    %312 = vmatpush1.msra.mxu0 %v148
    %313 = vmatprep.subr.mxu0 %v151
    %314 = vmatpush1.msra.mxu0 %v150
    %315 = vmatprep.subr.mxu0 %v153
    %316 = vmatpush1.msra.mxu0 %v152
    %317 = vmatprep.subr.mxu0 %v155
    %318 = vmatpush1.msra.mxu0 %v154
    %319 = vmatprep.subr.mxu0 %v157
    %320 = vmatpush1.msra.mxu0 %v156
    %321 = vmatprep.subr.mxu0 %v159
    %322 = vmatpush1.msra.mxu0 %v158
    %323 = vmatprep.subr.mxu0 %v161
    %324 = vmatpush1.msra.mxu0 %v160
    %325 = vmatprep.subr.mxu0 %v163
    %326 = vmatpush1.msra.mxu0 %v162
    %327 = vmatprep.subr.mxu0 %v165
    %328 = vmatpush1.msra.mxu0 %v164
    %329 = vmatprep.subr.mxu0 %v167
    %330 = vmatpush1.msra.mxu0 %v166
    %331 = vmatprep.subr.mxu0 %v169
    %332 = vmatpush1.msra.mxu0 %v168
    %333 = vmatprep.subr.mxu0 %v171
    %334 = vmatpush1.msra.mxu0 %v170
    %335 = vmatprep.subr.mxu0 %v173
    %336 = vmatpush1.msra.mxu0 %v172
    %337 = vmatprep.subr.mxu0 %v175
    %338 = vmatpush1.msra.mxu0 %v174
    %339 = vmatprep.subr.mxu0 %v177
    %340 = vmatpush1.msra.mxu0 %v176
    %341 = vmatprep.subr.mxu0 %v179
    %342 = vmatpush1.msra.mxu0 %v178
    %343 = vmatprep.subr.mxu0 %v181
    %344 = vmatpush1.msra.mxu0 %v180
    %345 = vmatprep.subr.mxu0 %v183
    %346 = vmatpush1.msra.mxu0 %v182
    %347 = vmatprep.subr.mxu0 %v185
    %348 = vmatpush1.msra.mxu0 %v184
    %349 = vmatprep.mubr.f32.mxu0 %v284
    %350 = vmatmul.mubr.f32.gmra.mrb[0].mxu0 %v277
    %v351 = vpop.f32.mrb[0].mxu0
    %v352 = vadd.f32 0.0, %v351
    %v353 = vpop.f32.mrb[0].mxu0
    %v354 = vadd.f32 0.0, %v353
    %355 = vdwg.mxu0
    %v356 = vmul.f32 %v352, 0.03125
    %v357 = vmul.f32 %v354, 0.03125
    %v358 = vadd.f32 %v356, 1e-05
    %v359 = vadd.f32 %v357, 1e-05
    %v360 = vrsqrt.pop %v358
    %v361 = vrsqrt.pop %v359
    %v362 = vlaneseq
    %v363 = vshrl.u32 %v362, 7
    %v364 = vsub.s32 0, %v363
    %v365 = vrot.slane %v360, %v364
    %v366 = vlaneseq
    %v367 = vshrl.u32 %v366, 7
    %v368 = vsub.s32 0, %v367
    %v369 = vrot.slane %v361, %v368
    %v370 = vmul.f32 %v267, %v365
    %v371 = vmul.f32 %v268, %v369
    %v372 = vld [vmem:[%s3] ss:$2 sm:$0x3]
    %v374 = vlaneseq
    %v375 = vshrl.u32 %v374, 7
    %v376 = vsub.s32 0, %v375
    %v377 = vrot.slane %v372, %v376
    %v378 = vlaneseq
    %v379 = vshrl.u32 %v378, 7
    %v380 = vsub.s32 1, %v379
    %v381 = vrot.slane %v372, %v380
    %v384 = vmul.f32 %v370, %v377
    %v385 = vmul.f32 %v371, %v381
    %s386 = scalar_lea.vmem %s3, 1
    %v387 = vld [vmem:[%s386] ss:$2 sm:$0x3]
    %v389 = vlaneseq
    %v390 = vshrl.u32 %v389, 7
    %v391 = vsub.s32 0, %v390
    %v392 = vrot.slane %v387, %v391
    %v393 = vlaneseq
    %v394 = vshrl.u32 %v393, 7
    %v395 = vsub.s32 1, %v394
    %v396 = vrot.slane %v387, %v395
    %v399 = vadd.f32 %v384, %v392
    %v400 = vadd.f32 %v385, %v396
    %v401 = vmax.f32 %v399, 0.0
    %v402 = vmax.f32 %v400, 0.0
    %v405 = vcombine.low %v401, %v402
    %v407 = vunpack.c.l.s4 1983009808
    %v408 = vunpack.c.0.s8 %v407
    %v409 = vlaneseq
    %v410 = vshrl.u32 %v409, 7
    %v411 = vsub.s32 %v408, %v410
    %v412 = vrot.slane %v405, %v411
    %414 = vst [vmem:[%s4] sm:$0xf] %v412
    // Predicated region
    $region22: #{generator_forward.4} parent=1 // pred_check
      _
    $region23: #{generator_forward.4} parent=1 // pred_check_branch
      %416 = sbr.rel (0) target = $region25
    $region24: #{generator_forward.4} parent=1 // pred_region
      _
    $region25: #{generator_forward.4} parent=1 // pred_fallthru
      _
    // Predicated region
    $region26: #{generator_forward.4} parent=1 // pred_check
      _
    $region27: #{generator_forward.4} parent=1 // pred_check_branch
      %418 = sbr.rel (0) target = $region29
    $region28: #{generator_forward.4} parent=1 // pred_region
      _
    $region29: #{generator_forward.4} parent=1 // pred_fallthru
      _
    %419 = vsyncpa [#allocation3], 1

// kernel: generator_forward.5
$region0: #{generator_forward.5}
  #allocation0 [shape = 'u32[]', space=smem, size = 0x4, offset = 0x4, fixed_abs, tag = 'smem constant byte address 0x4 - core index']
  #allocation1 [shape = 'u32[144,128]{1,0:T(1,128)}', space=vmem, size = 0x12000, scoped, tag = 'internal scratch']
  %s0 = inlined_call_operand.vmem [shape: f32[32,144], index: 0, kind: input, shape index: {}]
  %s1 = inlined_call_operand.vmem [shape: f32[144,32], index: 1, kind: input, shape index: {}]
  %s2 = inlined_call_operand.vmem [shape: f32[32,32], index: 2, kind: input, shape index: {}]
  %s3 = inlined_call_operand.vmem [shape: f32[2,32], index: 3, kind: input, shape index: {}]
  %s4 = inlined_call_operand.vmem [shape: f32[32,32], index: 4, kind: output, shape index: {}]
  %s5 = sld [smem:[#allocation0]]
  $region26: #{generator_forward.5} parent=0
    _
  %s7 = ssub.s32 1, %s5
  %s8 = scalar_select 0, %s7, %s5
  // Predicated region
  $region2: #{generator_forward.5} parent=0 // pred_check
    _
  $region3: #{generator_forward.5} parent=0 // pred_check_branch
    %10 = sbr.rel (0) target = $region5
  $region4: #{generator_forward.5} parent=0 // pred_region
    _
  $region5: #{generator_forward.5} parent=0 // pred_fallthru
    _
  // Predicated region
  $region6: #{generator_forward.5} parent=0 // pred_check
    _
  $region7: #{generator_forward.5} parent=0 // pred_check_branch
    %12 = sbr.rel (0) target = $region9
  $region8: #{generator_forward.5} parent=0 // pred_region
    _
  $region9: #{generator_forward.5} parent=0 // pred_fallthru
    _
  // Predicated region
  $region10: #{generator_forward.5} parent=0 // pred_check
    _
  $region11: #{generator_forward.5} parent=0 // pred_check_branch
    %14 = sbr.rel (0) target = $region13
  $region12: #{generator_forward.5} parent=0 // pred_region
    _
  $region13: #{generator_forward.5} parent=0 // pred_fallthru
    _
  // Predicated region
  $region14: #{generator_forward.5} parent=0 // pred_check
    _
  $region15: #{generator_forward.5} parent=0 // pred_check_branch
    %16 = sbr.rel (0) target = $region17
  $region16: #{generator_forward.5} parent=0 // pred_region
    _
  $region17: #{generator_forward.5} parent=0 // pred_fallthru
    _
  %v17 = vld [vmem:[%s0] sm:$0xff]
  %v18 = vld [vmem:[%s0 + $0x8] sm:$0xff]
  %v19 = vld [vmem:[%s0 + $0x10] sm:$0xff]
  %v20 = vld [vmem:[%s0 + $0x18] sm:$0xff]
  %v21 = vld [vmem:[%s0 + $0x20] sm:$0xff]
  %v22 = vld [vmem:[%s0 + $0x28] sm:$0xff]
  %v23 = vld [vmem:[%s0 + $0x30] sm:$0xff]
  %v24 = vld [vmem:[%s0 + $0x38] sm:$0xff]
  %v25 = vld [vmem:[%s1] sm:$0xff]
  %v26 = vld [vmem:[%s1 + $0x8] sm:$0xff]
  %v27 = vld [vmem:[%s1 + $0x10] sm:$0xff]
  %v28 = vld [vmem:[%s1 + $0x18] sm:$0xff]
  %v29 = vld [vmem:[%s1 + $0x20] sm:$0xff]
  %v30 = vld [vmem:[%s1 + $0x28] sm:$0xff]
  %v31 = vld [vmem:[%s1 + $0x30] sm:$0xff]
  %v32 = vld [vmem:[%s1 + $0x38] sm:$0xff]
  %v33 = vld [vmem:[%s1 + $0x40] sm:$0xff]
  %v34 = vld [vmem:[%s1 + $0x48] sm:$0xff]
  %v35 = vld [vmem:[%s1 + $0x50] sm:$0xff]
  %v36 = vld [vmem:[%s1 + $0x58] sm:$0xff]
  %v37 = vld [vmem:[%s1 + $0x60] sm:$0xff]
  %v38 = vld [vmem:[%s1 + $0x68] sm:$0xff]
  %v39 = vld [vmem:[%s1 + $0x70] sm:$0xff]
  %v40 = vld [vmem:[%s1 + $0x78] sm:$0xff]
  %v41 = vld [vmem:[%s1 + $0x80] sm:$0xff]
  %v42 = vld [vmem:[%s1 + $0x88] sm:$0xff]
  %vm43 = vcmask 130048
  %v45 = vsel %vm43, %v18, 0
  %v48 = vsel %vm43, %v20, 0
  %v51 = vsel %vm43, %v22, 0
  %v54 = vsel %vm43, %v24, 0
  %56 = vmatprep.subr.mxu0 0.0
  %57 = vmatpush1.msra.mxu0 %v25
  %58 = vmatprep.subr.mxu0 0.0
  %59 = vmatpush1.msra.mxu0 %v26
  %60 = vmatprep.subr.mxu0 0.0
  %61 = vmatpush1.msra.mxu0 %v27
  %62 = vmatprep.subr.mxu0 0.0
  %63 = vmatpush1.msra.mxu0 %v28
  %64 = vmatprep.subr.mxu0 0.0
  %65 = vmatpush1.msra.mxu0 %v29
  %66 = vmatprep.subr.mxu0 0.0
  %67 = vmatpush1.msra.mxu0 %v30
  %68 = vmatprep.subr.mxu0 0.0
  %69 = vmatpush1.msra.mxu0 %v31
  %70 = vmatprep.subr.mxu0 0.0
  %71 = vmatpush1.msra.mxu0 %v32
  %72 = vmatprep.subr.mxu0 0.0
  %73 = vmatpush1.msra.mxu0 %v33
  %74 = vmatprep.subr.mxu0 0.0
  %75 = vmatpush1.msra.mxu0 %v34
  %76 = vmatprep.subr.mxu0 0.0
  %77 = vmatpush1.msra.mxu0 %v35
  %78 = vmatprep.subr.mxu0 0.0
  %79 = vmatpush1.msra.mxu0 %v36
  %80 = vmatprep.subr.mxu0 0.0
  %81 = vmatpush1.msra.mxu0 %v37
  %82 = vmatprep.subr.mxu0 0.0
  %83 = vmatpush1.msra.mxu0 %v38
  %84 = vmatprep.subr.mxu0 0.0
  %85 = vmatpush1.msra.mxu0 %v39
  %86 = vmatprep.subr.mxu0 0.0
  %87 = vmatpush1.msra.mxu0 %v40
  %88 = vmatprep.subr.mxu0 0.0
  %89 = vmatpush1.msra.mxu0 %v41
  %90 = vmatprep.subr.mxu0 0.0
  %91 = vmatpush1.msra.mxu0 %v42
  %92 = vmatprep.subr.mxu0 0.0
  %93 = vmatpush1.msra.mxu0 0.0
  %94 = vmatprep.subr.mxu0 0.0
  %95 = vmatpush1.msra.mxu0 0.0
  %96 = vmatprep.subr.mxu0 0.0
  %97 = vmatpush1.msra.mxu0 0.0
  %98 = vmatprep.subr.mxu0 0.0
  %99 = vmatpush1.msra.mxu0 0.0
  %100 = vmatprep.subr.mxu0 0.0
  %101 = vmatpush1.msra.mxu0 0.0
  %102 = vmatprep.subr.mxu0 0.0
  %103 = vmatpush1.msra.mxu0 0.0
  %104 = vmatprep.subr.mxu0 0.0
  %105 = vmatpush1.msra.mxu0 0.0
  %106 = vmatprep.subr.mxu0 0.0
  %107 = vmatpush1.msra.mxu0 0.0
  %108 = vmatprep.subr.mxu0 0.0
  %109 = vmatpush1.msra.mxu0 0.0
  %110 = vmatprep.subr.mxu0 0.0
  %111 = vmatpush1.msra.mxu0 0.0
  %112 = vmatprep.subr.mxu0 0.0
  %113 = vmatpush1.msra.mxu0 0.0
  %114 = vmatprep.subr.mxu0 0.0
  %115 = vmatpush1.msra.mxu0 0.0
  %116 = vmatprep.subr.mxu0 0.0
  %117 = vmatpush1.msra.mxu0 0.0
  %118 = vmatprep.subr.mxu0 0.0
  %119 = vmatpush1.msra.mxu0 0.0
  %120 = vmatprep.mubr.f32.mxu0 %v45
  %121 = vmatmul.mubr.f32.gmra.mrb[0].mxu0 %v17
  %v122 = vpop.f32.mrb[0].mxu0
  %v123 = vadd.f32 0.0, %v122
  %v124 = vpop.f32.mrb[0].mxu0
  %125 = vmatprep.mubr.f32.mxu0 %v48
  %126 = vmatmul.mubr.f32.gmra.mrb[0].mxu0 %v19
  %v127 = vpop.f32.mrb[0].mxu0
  %v128 = vadd.f32 0.0, %v127
  %v129 = vpop.f32.mrb[0].mxu0
  %130 = vmatprep.mubr.f32.mxu0 %v51
  %131 = vmatmul.mubr.f32.gmra.mrb[0].mxu0 %v21
  %v132 = vpop.f32.mrb[0].mxu0
  %v133 = vadd.f32 0.0, %v132
  %v134 = vpop.f32.mrb[0].mxu0
  %135 = vmatprep.mubr.f32.mxu0 %v54
  %136 = vmatmul.mubr.f32.gmra.mrb[0].mxu0 %v23
  %v137 = vpop.f32.mrb[0].mxu0
  %v138 = vadd.f32 0.0, %v137
  %v139 = vpop.f32.mrb[0].mxu0
  %140 = vdwg.mxu0
  %vm141 = vcmask 261120
  %v142 = vsel %vm141, %v123, 0.0
  %v143 = vsel %vm141, %v128, 0.0
  %v144 = vadd.f32 %v142, %v143
  %v145 = vsel %vm141, %v133, 0.0
  %v146 = vadd.f32 %v144, %v145
  %v147 = vsel %vm141, %v138, 0.0
  %v148 = vadd.f32 %v146, %v147
  %v149 = vrot.slane %v148, 4
  %v150 = vadd.f32 %v148, %v149
  %v151 = vrot.slane %v150, 2
  %v152 = vadd.f32 %v150, %v151
  %v153 = vrot.slane %v152, 1
  %v154 = vadd.f32 %v152, %v153
  %v155 = vld [vmem:[%s2] sm:$0xff]
  %v156 = vld [vmem:[%s2 + $0x8] sm:$0xff]
  %v157 = vld [vmem:[%s2 + $0x10] sm:$0xff]
  %v158 = vld [vmem:[%s2 + $0x18] sm:$0xff]
  %v160 = vsel %vm141, %v154, 0
  %162 = vmatprep.subr.mxu0 0.0
  %163 = vmatpush1.msra.mxu0 %v155
  %164 = vmatprep.subr.mxu0 0.0
  %165 = vmatpush1.msra.mxu0 %v156
  %166 = vmatprep.subr.mxu0 0.0
  %167 = vmatpush1.msra.mxu0 %v157
  %168 = vmatprep.subr.mxu0 0.0
  %169 = vmatpush1.msra.mxu0 %v158
  %170 = vmatprep.subr.mxu0 0.0
  %171 = vmatpush1.msra.mxu0 0.0
  %172 = vmatprep.subr.mxu0 0.0
  %173 = vmatpush1.msra.mxu0 0.0
  %174 = vmatprep.subr.mxu0 0.0
  %175 = vmatpush1.msra.mxu0 0.0
  %176 = vmatprep.subr.mxu0 0.0
  %177 = vmatpush1.msra.mxu0 0.0
  %178 = vmatprep.subr.mxu0 0.0
  %179 = vmatpush1.msra.mxu0 0.0
  %180 = vmatprep.subr.mxu0 0.0
  %181 = vmatpush1.msra.mxu0 0.0
  %182 = vmatprep.subr.mxu0 0.0
  %183 = vmatpush1.msra.mxu0 0.0
  %184 = vmatprep.subr.mxu0 0.0
  %185 = vmatpush1.msra.mxu0 0.0
  %186 = vmatprep.subr.mxu0 0.0
  %187 = vmatpush1.msra.mxu0 0.0
  %188 = vmatprep.subr.mxu0 0.0
  %189 = vmatpush1.msra.mxu0 0.0
  %190 = vmatprep.subr.mxu0 0.0
  %191 = vmatpush1.msra.mxu0 0.0
  %192 = vmatprep.subr.mxu0 0.0
  %193 = vmatpush1.msra.mxu0 0.0
  %194 = vmatprep.subr.mxu0 0.0
  %195 = vmatpush1.msra.mxu0 0.0
  %196 = vmatprep.subr.mxu0 0.0
  %197 = vmatpush1.msra.mxu0 0.0
  %198 = vmatprep.subr.mxu0 0.0
  %199 = vmatpush1.msra.mxu0 0.0
  %200 = vmatprep.subr.mxu0 0.0
  %201 = vmatpush1.msra.mxu0 0.0
  %202 = vmatprep.subr.mxu0 0.0
  %203 = vmatpush1.msra.mxu0 0.0
  %204 = vmatprep.subr.mxu0 0.0
  %205 = vmatpush1.msra.mxu0 0.0
  %206 = vmatprep.subr.mxu0 0.0
  %207 = vmatpush1.msra.mxu0 0.0
  %208 = vmatprep.subr.mxu0 0.0
  %209 = vmatpush1.msra.mxu0 0.0
  %210 = vmatprep.subr.mxu0 0.0
  %211 = vmatpush1.msra.mxu0 0.0
  %212 = vmatprep.subr.mxu0 0.0
  %213 = vmatpush1.msra.mxu0 0.0
  %214 = vmatprep.subr.mxu0 0.0
  %215 = vmatpush1.msra.mxu0 0.0
  %216 = vmatprep.subr.mxu0 0.0
  %217 = vmatpush1.msra.mxu0 0.0
  %218 = vmatprep.subr.mxu0 0.0
  %219 = vmatpush1.msra.mxu0 0.0
  %220 = vmatprep.subr.mxu0 0.0
  %221 = vmatpush1.msra.mxu0 0.0
  %222 = vmatprep.subr.mxu0 0.0
  %223 = vmatpush1.msra.mxu0 0.0
  %224 = vmatprep.subr.mxu0 0.0
  %225 = vmatpush1.msra.mxu0 0.0
  %226 = vmatprep.mubr.f32.mxu0 0.0
  %227 = vmatmul.mubr.f32.gmra.mrb[0].mxu0 %v160
  %v228 = vpop.f32.mrb[0].mxu0
  %v229 = vadd.f32 0.0, %v228
  %v230 = vpop.f32.mrb[0].mxu0
  %231 = vdwg.mxu0
  %v232 = vmul.f32 %v229, 0.0078125
  %v233 = vlaneseq
  %v234 = vshrl.u32 %v233, 7
  %v235 = vsub.s32 0, %v234
  %v236 = vrot.slane %v232, %v235
  %v237 = vsub.f32 %v123, %v236
  %v238 = vsub.f32 %v128, %v236
  %v239 = vsub.f32 %v133, %v236
  %v240 = vsub.f32 %v138, %v236
  %v241 = vmul.f32 %v237, %v237
  %v242 = vmul.f32 %v238, %v238
  %v243 = vmul.f32 %v239, %v239
  %v244 = vmul.f32 %v240, %v240
  %v245 = vsel %vm141, %v241, 0.0
  %v246 = vsel %vm141, %v242, 0.0
  %v247 = vadd.f32 %v245, %v246
  %v248 = vsel %vm141, %v243, 0.0
  %v249 = vadd.f32 %v247, %v248
  %v250 = vsel %vm141, %v244, 0.0
  %v251 = vadd.f32 %v249, %v250
  %v252 = vrot.slane %v251, 4
  %v253 = vadd.f32 %v251, %v252
  %v254 = vrot.slane %v253, 2
  %v255 = vadd.f32 %v253, %v254
  %v256 = vrot.slane %v255, 1
  %v257 = vadd.f32 %v255, %v256
  %v259 = vsel %vm141, %v257, 0
  %261 = vmatprep.subr.mxu0 0.0
  %262 = vmatpush1.msra.mxu0 %v155
  %263 = vmatprep.subr.mxu0 0.0
  %264 = vmatpush1.msra.mxu0 %v156
  %265 = vmatprep.subr.mxu0 0.0
  %266 = vmatpush1.msra.mxu0 %v157
  %267 = vmatprep.subr.mxu0 0.0
  %268 = vmatpush1.msra.mxu0 %v158
  %269 = vmatprep.subr.mxu0 0.0
  %270 = vmatpush1.msra.mxu0 0.0
  %271 = vmatprep.subr.mxu0 0.0
  %272 = vmatpush1.msra.mxu0 0.0
  %273 = vmatprep.subr.mxu0 0.0
  %274 = vmatpush1.msra.mxu0 0.0
  %275 = vmatprep.subr.mxu0 0.0
  %276 = vmatpush1.msra.mxu0 0.0
  %277 = vmatprep.subr.mxu0 0.0
  %278 = vmatpush1.msra.mxu0 0.0
  %279 = vmatprep.subr.mxu0 0.0
  %280 = vmatpush1.msra.mxu0 0.0
  %281 = vmatprep.subr.mxu0 0.0
  %282 = vmatpush1.msra.mxu0 0.0
  %283 = vmatprep.subr.mxu0 0.0
  %284 = vmatpush1.msra.mxu0 0.0
  %285 = vmatprep.subr.mxu0 0.0
  %286 = vmatpush1.msra.mxu0 0.0
  %287 = vmatprep.subr.mxu0 0.0
  %288 = vmatpush1.msra.mxu0 0.0
  %289 = vmatprep.subr.mxu0 0.0
  %290 = vmatpush1.msra.mxu0 0.0
  %291 = vmatprep.subr.mxu0 0.0
  %292 = vmatpush1.msra.mxu0 0.0
  %293 = vmatprep.subr.mxu0 0.0
  %294 = vmatpush1.msra.mxu0 0.0
  %295 = vmatprep.subr.mxu0 0.0
  %296 = vmatpush1.msra.mxu0 0.0
  %297 = vmatprep.subr.mxu0 0.0
  %298 = vmatpush1.msra.mxu0 0.0
  %299 = vmatprep.subr.mxu0 0.0
  %300 = vmatpush1.msra.mxu0 0.0
  %301 = vmatprep.subr.mxu0 0.0
  %302 = vmatpush1.msra.mxu0 0.0
  %303 = vmatprep.subr.mxu0 0.0
  %304 = vmatpush1.msra.mxu0 0.0
  %305 = vmatprep.subr.mxu0 0.0
  %306 = vmatpush1.msra.mxu0 0.0
  %307 = vmatprep.subr.mxu0 0.0
  %308 = vmatpush1.msra.mxu0 0.0
  %309 = vmatprep.subr.mxu0 0.0
  %310 = vmatpush1.msra.mxu0 0.0
  %311 = vmatprep.subr.mxu0 0.0
  %312 = vmatpush1.msra.mxu0 0.0
  %313 = vmatprep.subr.mxu0 0.0
  %314 = vmatpush1.msra.mxu0 0.0
  %315 = vmatprep.subr.mxu0 0.0
  %316 = vmatpush1.msra.mxu0 0.0
  %317 = vmatprep.subr.mxu0 0.0
  %318 = vmatpush1.msra.mxu0 0.0
  %319 = vmatprep.subr.mxu0 0.0
  %320 = vmatpush1.msra.mxu0 0.0
  %321 = vmatprep.subr.mxu0 0.0
  %322 = vmatpush1.msra.mxu0 0.0
  %323 = vmatprep.subr.mxu0 0.0
  %324 = vmatpush1.msra.mxu0 0.0
  %325 = vmatprep.mubr.f32.mxu0 0.0
  %326 = vmatmul.mubr.f32.gmra.mrb[0].mxu0 %v259
  %v327 = vpop.f32.mrb[0].mxu0
  %v328 = vadd.f32 0.0, %v327
  %v329 = vpop.f32.mrb[0].mxu0
  %330 = vdwg.mxu0
  %v331 = vmul.f32 %v328, 0.0078125
  %v332 = vadd.f32 %v331, 1e-05
  %v333 = vrsqrt.pop %v332
  %v334 = vlaneseq
  %v335 = vshrl.u32 %v334, 7
  %v336 = vsub.s32 0, %v335
  %v337 = vrot.slane %v333, %v336
  %v338 = vmul.f32 %v237, %v337
  %v339 = vmul.f32 %v238, %v337
  %v340 = vmul.f32 %v239, %v337
  %v341 = vmul.f32 %v240, %v337
  %v342 = vld [vmem:[%s3] sm:$0x1]
  %v343 = vlaneseq
  %v344 = vshrl.u32 %v343, 7
  %v345 = vsub.s32 0, %v344
  %v346 = vrot.slane %v342, %v345
  %v347 = vmul.f32 %v338, %v346
  %v348 = vmul.f32 %v339, %v346
  %v349 = vmul.f32 %v340, %v346
  %v350 = vmul.f32 %v341, %v346
  %v351 = vld [vmem:[%s3 + $0x1] sm:$0x1]
  %v352 = vlaneseq
  %v353 = vshrl.u32 %v352, 7
  %v354 = vsub.s32 0, %v353
  %v355 = vrot.slane %v351, %v354
  %v356 = vadd.f32 %v347, %v355
  %v357 = vadd.f32 %v348, %v355
  %v358 = vadd.f32 %v349, %v355
  %v359 = vadd.f32 %v350, %v355
  %v360 = vmax.f32 %v356, 0.0
  %v361 = vmax.f32 %v357, 0.0
  %v362 = vmax.f32 %v358, 0.0
  %v363 = vmax.f32 %v359, 0.0
  %364 = vst.msk [vmem:[%s4] sm:$0xff] %vm141, %v360
  %365 = vst.msk [vmem:[%s4 + $0x8] sm:$0xff] %vm141, %v361
  %366 = vst.msk [vmem:[%s4 + $0x10] sm:$0xff] %vm141, %v362
  %367 = vst.msk [vmem:[%s4 + $0x18] sm:$0xff] %vm141, %v363
  // Predicated region
  $region18: #{generator_forward.5} parent=0 // pred_check
    _
  $region19: #{generator_forward.5} parent=0 // pred_check_branch
    %369 = sbr.rel (0) target = $region21
  $region20: #{generator_forward.5} parent=0 // pred_region
    _
  $region21: #{generator_forward.5} parent=0 // pred_fallthru
    _
  // Predicated region
  $region22: #{generator_forward.5} parent=0 // pred_check
    _
  $region23: #{generator_forward.5} parent=0 // pred_check_branch
    %371 = sbr.rel (0) target = $region25
  $region24: #{generator_forward.5} parent=0 // pred_region
    _
  $region25: #{generator_forward.5} parent=0 // pred_fallthru
    _

// kernel: tile.58
$region0: #{tile.58}
  %s0 = inlined_call_operand.vmem [shape: f32[4,4], index: 0, kind: input, shape index: {}]
  %s1 = inlined_call_operand.vmem [shape: f32[1,16], index: 1, kind: output, shape index: {}]
  $region1: #{tile.58} parent=0
    #allocation0 [shape = 'u8[4096]{0}', space=vmem, size = 0x1000, scoped, tag = 'scoped mem for output reshape']
    #allocation1 [shape = 'u8[4096]{0}', space=vmem, size = 0x1000, scoped, tag = 'scoped mem for input reshape']
    %s3 = sshllo.u32 0, 4
    %v4 = vld [vmem:[%s0] sm:%s3]
    %5 = vst [vmem:[#allocation1] sm:%s3] %v4
    %v6 = vld [vmem:[#allocation1] sm:$0x1]
    %vm7 = vcmask 31744
    %8 = vst.msk [vmem:[#allocation0] sm:$0x1] %vm7, %v6
    %s9 = scalar_lea.vmem [#allocation1], 3
    %v10 = vld [vmem:[%s9] sm:$0x1]
    %11 = vrot.lane.b32.xlu0 %v10, 12
    %v12 = vpop.permute.xlu0 %11
    %vm13 = vcmask 130144
    %14 = vst.msk [vmem:[#allocation0] sm:$0x1] %vm13, %v12
    %s15 = scalar_lea.vmem [#allocation1], 2
    %v16 = vld [vmem:[%s15] sm:$0x1]
    %17 = vrot.lane.b32.xlu0 %v16, 8
    %v18 = vpop.permute.xlu0 %17
    %vm19 = vcmask 97344
    %20 = vst.msk [vmem:[#allocation0] sm:$0x1] %vm19, %v18
    %s21 = scalar_lea.vmem [#allocation1], 1
    %v22 = vld [vmem:[%s21] sm:$0x1]
    %23 = vrot.lane.b32.xlu0 %v22, 4
    %v24 = vpop.permute.xlu0 %23
    %vm25 = vcmask 64544
    %26 = vst.msk [vmem:[#allocation0] sm:$0x1] %vm25, %v24
    %s28 = sshllo.u32 0, 1
    %v30 = vld [vmem:[#allocation0] sm:%s28]
    %s31 = sshllo.u32 0, 1
    %32 = vst [vmem:[%s1] sm:%s31] %v30

// kernel: tile.53
$region0: #{tile.53}
  #allocation0 [shape = 's32[1]{0}', space=sflag, size = 0x4, scoped, tag = 'scoped memory for tile.53']
  %s0 = inlined_call_operand.vmem [shape: f32[4], index: 0, kind: input, shape index: {}]
  %s1 = inlined_call_operand.vmem [shape: f32[4,4], index: 1, kind: output, shape index: {}]
  // Predicated region
  $region2: #{tile.53} parent=0 // pred_check
    _
  $region3: #{tile.53} parent=0 // pred_check_branch
    %3 = sbr.rel (0) target = $region5
  $region4: #{tile.53} parent=0 // pred_region
    _
  $region5: #{tile.53} parent=0 // pred_fallthru
    _
  %v4 = vld [vmem:[%s0] ss:$0 sm:$0xff]
  %5 = vst [vmem:[%s1] sm:$0xf] %v4

// kernel: generator_forward.6
$region0: #{generator_forward.6}
  #allocation0 [shape = 'u32[]', space=smem, size = 0x4, offset = 0x4, fixed_abs, tag = 'smem constant byte address 0x4 - core index']
  #allocation1 [shape = 'u32[144,128]{1,0:T(1,128)}', space=vmem, size = 0x12000, scoped, tag = 'internal scratch']
  %s0 = inlined_call_operand.vmem [shape: f32[128,72], index: 0, kind: input, shape index: {}]
  %s1 = inlined_call_operand.vmem [shape: f32[72,16], index: 1, kind: input, shape index: {}]
  %s2 = inlined_call_operand.vmem [shape: f32[16,16], index: 2, kind: input, shape index: {}]
  %s3 = inlined_call_operand.vmem [shape: f32[2,16], index: 3, kind: input, shape index: {}]
  %s4 = inlined_call_operand.vmem [shape: f32[128,16], index: 4, kind: output, shape index: {}]
  %s5 = sld [smem:[#allocation0]]
  $region26: #{generator_forward.6} parent=0
    _
  %s7 = ssub.s32 1, %s5
  %s8 = scalar_select 0, %s7, %s5
  // Predicated region
  $region2: #{generator_forward.6} parent=0 // pred_check
    _
  $region3: #{generator_forward.6} parent=0 // pred_check_branch
    %10 = sbr.rel (0) target = $region5
  $region4: #{generator_forward.6} parent=0 // pred_region
    _
  $region5: #{generator_forward.6} parent=0 // pred_fallthru
    _
  // Predicated region
  $region6: #{generator_forward.6} parent=0 // pred_check
    _
  $region7: #{generator_forward.6} parent=0 // pred_check_branch
    %12 = sbr.rel (0) target = $region9
  $region8: #{generator_forward.6} parent=0 // pred_region
    _
  $region9: #{generator_forward.6} parent=0 // pred_fallthru
    _
  // Predicated region
  $region10: #{generator_forward.6} parent=0 // pred_check
    _
  $region11: #{generator_forward.6} parent=0 // pred_check_branch
    %14 = sbr.rel (0) target = $region13
  $region12: #{generator_forward.6} parent=0 // pred_region
    _
  $region13: #{generator_forward.6} parent=0 // pred_fallthru
    _
  // Predicated region
  $region14: #{generator_forward.6} parent=0 // pred_check
    _
  $region15: #{generator_forward.6} parent=0 // pred_check_branch
    %16 = sbr.rel (0) target = $region17
  $region16: #{generator_forward.6} parent=0 // pred_region
    _
  $region17: #{generator_forward.6} parent=0 // pred_fallthru
    _
  %v17 = vld [vmem:[%s0] sm:$0xff]
  %v18 = vld [vmem:[%s0 + $0x8] sm:$0xff]
  %v19 = vld [vmem:[%s0 + $0x10] sm:$0xff]
  %v20 = vld [vmem:[%s0 + $0x18] sm:$0xff]
  %v21 = vld [vmem:[%s0 + $0x20] sm:$0xff]
  %v22 = vld [vmem:[%s0 + $0x28] sm:$0xff]
  %v23 = vld [vmem:[%s0 + $0x30] sm:$0xff]
  %v24 = vld [vmem:[%s0 + $0x38] sm:$0xff]
  %v25 = vld [vmem:[%s0 + $0x40] sm:$0xff]
  %v26 = vld [vmem:[%s0 + $0x48] sm:$0xff]
  %v27 = vld [vmem:[%s0 + $0x50] sm:$0xff]
  %v28 = vld [vmem:[%s0 + $0x58] sm:$0xff]
  %v29 = vld [vmem:[%s0 + $0x60] sm:$0xff]
  %v30 = vld [vmem:[%s0 + $0x68] sm:$0xff]
  %v31 = vld [vmem:[%s0 + $0x70] sm:$0xff]
  %v32 = vld [vmem:[%s0 + $0x78] sm:$0xff]
  %v33 = vld [vmem:[%s1] sm:$0xff]
  %v34 = vld [vmem:[%s1 + $0x8] sm:$0xff]
  %v35 = vld [vmem:[%s1 + $0x10] sm:$0xff]
  %v36 = vld [vmem:[%s1 + $0x18] sm:$0xff]
  %v37 = vld [vmem:[%s1 + $0x20] sm:$0xff]
  %v38 = vld [vmem:[%s1 + $0x28] sm:$0xff]
  %v39 = vld [vmem:[%s1 + $0x30] sm:$0xff]
  %v40 = vld [vmem:[%s1 + $0x38] sm:$0xff]
  %v41 = vld [vmem:[%s1 + $0x40] sm:$0xff]
  %vm42 = vcmask 588800
  %v44 = vsel %vm42, %v17, 0
  %v47 = vsel %vm42, %v18, 0
  %v50 = vsel %vm42, %v19, 0
  %v53 = vsel %vm42, %v20, 0
  %v56 = vsel %vm42, %v21, 0
  %v59 = vsel %vm42, %v22, 0
  %v62 = vsel %vm42, %v23, 0
  %v65 = vsel %vm42, %v24, 0
  %v68 = vsel %vm42, %v25, 0
  %v71 = vsel %vm42, %v26, 0
  %v74 = vsel %vm42, %v27, 0
  %v77 = vsel %vm42, %v28, 0
  %v80 = vsel %vm42, %v29, 0
  %v83 = vsel %vm42, %v30, 0
  %v86 = vsel %vm42, %v31, 0
  %v89 = vsel %vm42, %v32, 0
  %91 = vmatprep.subr.mxu0 0.0
  %92 = vmatpush1.msra.mxu0 %v33
  %93 = vmatprep.subr.mxu0 0.0
  %94 = vmatpush1.msra.mxu0 %v34
  %95 = vmatprep.subr.mxu0 0.0
  %96 = vmatpush1.msra.mxu0 %v35
  %97 = vmatprep.subr.mxu0 0.0
  %98 = vmatpush1.msra.mxu0 %v36
  %99 = vmatprep.subr.mxu0 0.0
  %100 = vmatpush1.msra.mxu0 %v37
  %101 = vmatprep.subr.mxu0 0.0
  %102 = vmatpush1.msra.mxu0 %v38
  %103 = vmatprep.subr.mxu0 0.0
  %104 = vmatpush1.msra.mxu0 %v39
  %105 = vmatprep.subr.mxu0 0.0
  %106 = vmatpush1.msra.mxu0 %v40
  %107 = vmatprep.subr.mxu0 0.0
  %108 = vmatpush1.msra.mxu0 %v41
  %109 = vmatprep.subr.mxu0 0.0
  %110 = vmatpush1.msra.mxu0 0.0
  %111 = vmatprep.subr.mxu0 0.0
  %112 = vmatpush1.msra.mxu0 0.0
  %113 = vmatprep.subr.mxu0 0.0
  %114 = vmatpush1.msra.mxu0 0.0
  %115 = vmatprep.subr.mxu0 0.0
  %116 = vmatpush1.msra.mxu0 0.0
  %117 = vmatprep.subr.mxu0 0.0
  %118 = vmatpush1.msra.mxu0 0.0
  %119 = vmatprep.subr.mxu0 0.0
  %120 = vmatpush1.msra.mxu0 0.0
  %121 = vmatprep.subr.mxu0 0.0
  %122 = vmatpush1.msra.mxu0 0.0
  %123 = vmatprep.subr.mxu0 0.0
  %124 = vmatpush1.msra.mxu0 0.0
  %125 = vmatprep.subr.mxu0 0.0
  %126 = vmatpush1.msra.mxu0 0.0
  %127 = vmatprep.subr.mxu0 0.0
  %128 = vmatpush1.msra.mxu0 0.0
  %129 = vmatprep.subr.mxu0 0.0
  %130 = vmatpush1.msra.mxu0 0.0
  %131 = vmatprep.subr.mxu0 0.0
  %132 = vmatpush1.msra.mxu0 0.0
  %133 = vmatprep.subr.mxu0 0.0
  %134 = vmatpush1.msra.mxu0 0.0
  %135 = vmatprep.subr.mxu0 0.0
  %136 = vmatpush1.msra.mxu0 0.0
  %137 = vmatprep.subr.mxu0 0.0
  %138 = vmatpush1.msra.mxu0 0.0
  %139 = vmatprep.subr.mxu0 0.0
  %140 = vmatpush1.msra.mxu0 0.0
  %141 = vmatprep.subr.mxu0 0.0
  %142 = vmatpush1.msra.mxu0 0.0
  %143 = vmatprep.subr.mxu0 0.0
  %144 = vmatpush1.msra.mxu0 0.0
  %145 = vmatprep.subr.mxu0 0.0
  %146 = vmatpush1.msra.mxu0 0.0
  %147 = vmatprep.subr.mxu0 0.0
  %148 = vmatpush1.msra.mxu0 0.0
  %149 = vmatprep.subr.mxu0 0.0
  %150 = vmatpush1.msra.mxu0 0.0
  %151 = vmatprep.subr.mxu0 0.0
  %152 = vmatpush1.msra.mxu0 0.0
  %153 = vmatprep.subr.mxu0 0.0
  %154 = vmatpush1.msra.mxu0 0.0
  %155 = vmatprep.mubr.f32.mxu0 0.0
  %156 = vmatmul.mubr.f32.gmra.mrb[0].mxu0 %v44
  %v157 = vpop.f32.mrb[0].mxu0
  %v158 = vadd.f32 0.0, %v157
  %v159 = vpop.f32.mrb[0].mxu0
  %160 = vmatprep.mubr.f32.mxu0 0.0
  %161 = vmatmul.mubr.f32.gmra.mrb[0].mxu0 %v47
  %v162 = vpop.f32.mrb[0].mxu0
  %v163 = vadd.f32 0.0, %v162
  %v164 = vpop.f32.mrb[0].mxu0
  %165 = vmatprep.mubr.f32.mxu0 0.0
  %166 = vmatmul.mubr.f32.gmra.mrb[0].mxu0 %v50
  %v167 = vpop.f32.mrb[0].mxu0
  %v168 = vadd.f32 0.0, %v167
  %v169 = vpop.f32.mrb[0].mxu0
  %170 = vmatprep.mubr.f32.mxu0 0.0
  %171 = vmatmul.mubr.f32.gmra.mrb[0].mxu0 %v53
  %v172 = vpop.f32.mrb[0].mxu0
  %v173 = vadd.f32 0.0, %v172
  %v174 = vpop.f32.mrb[0].mxu0
  %175 = vmatprep.mubr.f32.mxu0 0.0
  %176 = vmatmul.mubr.f32.gmra.mrb[0].mxu0 %v56
  %v177 = vpop.f32.mrb[0].mxu0
  %v178 = vadd.f32 0.0, %v177
  %v179 = vpop.f32.mrb[0].mxu0
  %180 = vmatprep.mubr.f32.mxu0 0.0
  %181 = vmatmul.mubr.f32.gmra.mrb[0].mxu0 %v59
  %v182 = vpop.f32.mrb[0].mxu0
  %v183 = vadd.f32 0.0, %v182
  %v184 = vpop.f32.mrb[0].mxu0
  %185 = vmatprep.mubr.f32.mxu0 0.0
  %186 = vmatmul.mubr.f32.gmra.mrb[0].mxu0 %v62
  %v187 = vpop.f32.mrb[0].mxu0
  %v188 = vadd.f32 0.0, %v187
  %v189 = vpop.f32.mrb[0].mxu0
  %190 = vmatprep.mubr.f32.mxu0 0.0
  %191 = vmatmul.mubr.f32.gmra.mrb[0].mxu0 %v65
  %v192 = vpop.f32.mrb[0].mxu0
  %v193 = vadd.f32 0.0, %v192
  %v194 = vpop.f32.mrb[0].mxu0
  %195 = vmatprep.mubr.f32.mxu0 0.0
  %196 = vmatmul.mubr.f32.gmra.mrb[0].mxu0 %v68
  %v197 = vpop.f32.mrb[0].mxu0
  %v198 = vadd.f32 0.0, %v197
  %v199 = vpop.f32.mrb[0].mxu0
  %200 = vmatprep.mubr.f32.mxu0 0.0
  %201 = vmatmul.mubr.f32.gmra.mrb[0].mxu0 %v71
  %v202 = vpop.f32.mrb[0].mxu0
  %v203 = vadd.f32 0.0, %v202
  %v204 = vpop.f32.mrb[0].mxu0
  %205 = vmatprep.mubr.f32.mxu0 0.0
  %206 = vmatmul.mubr.f32.gmra.mrb[0].mxu0 %v74
  %v207 = vpop.f32.mrb[0].mxu0
  %v208 = vadd.f32 0.0, %v207
  %v209 = vpop.f32.mrb[0].mxu0
  %210 = vmatprep.mubr.f32.mxu0 0.0
  %211 = vmatmul.mubr.f32.gmra.mrb[0].mxu0 %v77
  %v212 = vpop.f32.mrb[0].mxu0
  %v213 = vadd.f32 0.0, %v212
  %v214 = vpop.f32.mrb[0].mxu0
  %215 = vmatprep.mubr.f32.mxu0 0.0
  %216 = vmatmul.mubr.f32.gmra.mrb[0].mxu0 %v80
  %v217 = vpop.f32.mrb[0].mxu0
  %v218 = vadd.f32 0.0, %v217
  %v219 = vpop.f32.mrb[0].mxu0
  %220 = vmatprep.mubr.f32.mxu0 0.0
  %221 = vmatmul.mubr.f32.gmra.mrb[0].mxu0 %v83
  %v222 = vpop.f32.mrb[0].mxu0
  %v223 = vadd.f32 0.0, %v222
  %v224 = vpop.f32.mrb[0].mxu0
  %225 = vmatprep.mubr.f32.mxu0 0.0
  %226 = vmatmul.mubr.f32.gmra.mrb[0].mxu0 %v86
  %v227 = vpop.f32.mrb[0].mxu0
  %v228 = vadd.f32 0.0, %v227
  %v229 = vpop.f32.mrb[0].mxu0
  %230 = vmatprep.mubr.f32.mxu0 0.0
  %231 = vmatmul.mubr.f32.gmra.mrb[0].mxu0 %v89
  %v232 = vpop.f32.mrb[0].mxu0
  %v233 = vadd.f32 0.0, %v232
  %v234 = vpop.f32.mrb[0].mxu0
  %235 = vdwg.mxu0
  %vm236 = vcmask 130048
  %v237 = vsel %vm236, %v158, 0.0
  %v238 = vsel %vm236, %v163, 0.0
  %v239 = vadd.f32 %v237, %v238
  %v240 = vsel %vm236, %v168, 0.0
  %v241 = vadd.f32 %v239, %v240
  %v242 = vsel %vm236, %v173, 0.0
  %v243 = vadd.f32 %v241, %v242
  %v244 = vsel %vm236, %v178, 0.0
  %v245 = vadd.f32 %v243, %v244
  %v246 = vsel %vm236, %v183, 0.0
  %v247 = vadd.f32 %v245, %v246
  %v248 = vsel %vm236, %v188, 0.0
  %v249 = vadd.f32 %v247, %v248
  %v250 = vsel %vm236, %v193, 0.0
  %v251 = vadd.f32 %v249, %v250
  %v252 = vsel %vm236, %v198, 0.0
  %v253 = vadd.f32 %v251, %v252
  %v254 = vsel %vm236, %v203, 0.0
  %v255 = vadd.f32 %v253, %v254
  %v256 = vsel %vm236, %v208, 0.0
  %v257 = vadd.f32 %v255, %v256
  %v258 = vsel %vm236, %v213, 0.0
  %v259 = vadd.f32 %v257, %v258
  %v260 = vsel %vm236, %v218, 0.0
  %v261 = vadd.f32 %v259, %v260
  %v262 = vsel %vm236, %v223, 0.0
  %v263 = vadd.f32 %v261, %v262
  %v264 = vsel %vm236, %v228, 0.0
  %v265 = vadd.f32 %v263, %v264
  %v266 = vsel %vm236, %v233, 0.0
  %v267 = vadd.f32 %v265, %v266
  %v268 = vrot.slane %v267, 4
  %v269 = vadd.f32 %v267, %v268
  %v270 = vrot.slane %v269, 2
  %v271 = vadd.f32 %v269, %v270
  %v272 = vrot.slane %v271, 1
  %v273 = vadd.f32 %v271, %v272
  %v274 = vld [vmem:[%s2] sm:$0xff]
  %v275 = vld [vmem:[%s2 + $0x8] sm:$0xff]
  %v277 = vsel %vm236, %v273, 0
  %279 = vmatprep.subr.mxu0 0.0
  %280 = vmatpush1.msra.mxu0 %v274
  %281 = vmatprep.subr.mxu0 0.0
  %282 = vmatpush1.msra.mxu0 %v275
  %283 = vmatprep.subr.mxu0 0.0
  %284 = vmatpush1.msra.mxu0 0.0
  %285 = vmatprep.subr.mxu0 0.0
  %286 = vmatpush1.msra.mxu0 0.0
  %287 = vmatprep.subr.mxu0 0.0
  %288 = vmatpush1.msra.mxu0 0.0
  %289 = vmatprep.subr.mxu0 0.0
  %290 = vmatpush1.msra.mxu0 0.0
  %291 = vmatprep.subr.mxu0 0.0
  %292 = vmatpush1.msra.mxu0 0.0
  %293 = vmatprep.subr.mxu0 0.0
  %294 = vmatpush1.msra.mxu0 0.0
  %295 = vmatprep.subr.mxu0 0.0
  %296 = vmatpush1.msra.mxu0 0.0
  %297 = vmatprep.subr.mxu0 0.0
  %298 = vmatpush1.msra.mxu0 0.0
  %299 = vmatprep.subr.mxu0 0.0
  %300 = vmatpush1.msra.mxu0 0.0
  %301 = vmatprep.subr.mxu0 0.0
  %302 = vmatpush1.msra.mxu0 0.0
  %303 = vmatprep.subr.mxu0 0.0
  %304 = vmatpush1.msra.mxu0 0.0
  %305 = vmatprep.subr.mxu0 0.0
  %306 = vmatpush1.msra.mxu0 0.0
  %307 = vmatprep.subr.mxu0 0.0
  %308 = vmatpush1.msra.mxu0 0.0
  %309 = vmatprep.subr.mxu0 0.0
  %310 = vmatpush1.msra.mxu0 0.0
  %311 = vmatprep.subr.mxu0 0.0
  %312 = vmatpush1.msra.mxu0 0.0
  %313 = vmatprep.subr.mxu0 0.0
  %314 = vmatpush1.msra.mxu0 0.0
  %315 = vmatprep.subr.mxu0 0.0
  %316 = vmatpush1.msra.mxu0 0.0
  %317 = vmatprep.subr.mxu0 0.0
  %318 = vmatpush1.msra.mxu0 0.0
  %319 = vmatprep.subr.mxu0 0.0
  %320 = vmatpush1.msra.mxu0 0.0
  %321 = vmatprep.subr.mxu0 0.0
  %322 = vmatpush1.msra.mxu0 0.0
  %323 = vmatprep.subr.mxu0 0.0
  %324 = vmatpush1.msra.mxu0 0.0
  %325 = vmatprep.subr.mxu0 0.0
  %326 = vmatpush1.msra.mxu0 0.0
  %327 = vmatprep.subr.mxu0 0.0
  %328 = vmatpush1.msra.mxu0 0.0
  %329 = vmatprep.subr.mxu0 0.0
  %330 = vmatpush1.msra.mxu0 0.0
  %331 = vmatprep.subr.mxu0 0.0
  %332 = vmatpush1.msra.mxu0 0.0
  %333 = vmatprep.subr.mxu0 0.0
  %334 = vmatpush1.msra.mxu0 0.0
  %335 = vmatprep.subr.mxu0 0.0
  %336 = vmatpush1.msra.mxu0 0.0
  %337 = vmatprep.subr.mxu0 0.0
  %338 = vmatpush1.msra.mxu0 0.0
  %339 = vmatprep.subr.mxu0 0.0
  %340 = vmatpush1.msra.mxu0 0.0
  %341 = vmatprep.subr.mxu0 0.0
  %342 = vmatpush1.msra.mxu0 0.0
  %343 = vmatprep.mubr.f32.mxu0 0.0
  %344 = vmatmul.mubr.f32.gmra.mrb[0].mxu0 %v277
  %v345 = vpop.f32.mrb[0].mxu0
  %v346 = vadd.f32 0.0, %v345
  %v347 = vpop.f32.mrb[0].mxu0
  %348 = vdwg.mxu0
  %v349 = vmul.f32 %v346, 0.001953125
  %v350 = vlaneseq
  %v351 = vshrl.u32 %v350, 7
  %v352 = vsub.s32 0, %v351
  %v353 = vrot.slane %v349, %v352
  %v354 = vsub.f32 %v158, %v353
  %v355 = vsub.f32 %v163, %v353
  %v356 = vsub.f32 %v168, %v353
  %v357 = vsub.f32 %v173, %v353
  %v358 = vsub.f32 %v178, %v353
  %v359 = vsub.f32 %v183, %v353
  %v360 = vsub.f32 %v188, %v353
  %v361 = vsub.f32 %v193, %v353
  %v362 = vsub.f32 %v198, %v353
  %v363 = vsub.f32 %v203, %v353
  %v364 = vsub.f32 %v208, %v353
  %v365 = vsub.f32 %v213, %v353
  %v366 = vsub.f32 %v218, %v353
  %v367 = vsub.f32 %v223, %v353
  %v368 = vsub.f32 %v228, %v353
  %v369 = vsub.f32 %v233, %v353
  %v370 = vmul.f32 %v354, %v354
  %v371 = vmul.f32 %v355, %v355
  %v372 = vmul.f32 %v356, %v356
  %v373 = vmul.f32 %v357, %v357
  %v374 = vmul.f32 %v358, %v358
  %v375 = vmul.f32 %v359, %v359
  %v376 = vmul.f32 %v360, %v360
  %v377 = vmul.f32 %v361, %v361
  %v378 = vmul.f32 %v362, %v362
  %v379 = vmul.f32 %v363, %v363
  %v380 = vmul.f32 %v364, %v364
  %v381 = vmul.f32 %v365, %v365
  %v382 = vmul.f32 %v366, %v366
  %v383 = vmul.f32 %v367, %v367
  %v384 = vmul.f32 %v368, %v368
  %v385 = vmul.f32 %v369, %v369
  %v386 = vsel %vm236, %v370, 0.0
  %v387 = vsel %vm236, %v371, 0.0
  %v388 = vadd.f32 %v386, %v387
  %v389 = vsel %vm236, %v372, 0.0
  %v390 = vadd.f32 %v388, %v389
  %v391 = vsel %vm236, %v373, 0.0
  %v392 = vadd.f32 %v390, %v391
  %v393 = vsel %vm236, %v374, 0.0
  %v394 = vadd.f32 %v392, %v393
  %v395 = vsel %vm236, %v375, 0.0
  %v396 = vadd.f32 %v394, %v395
  %v397 = vsel %vm236, %v376, 0.0
  %v398 = vadd.f32 %v396, %v397
  %v399 = vsel %vm236, %v377, 0.0
  %v400 = vadd.f32 %v398, %v399
  %v401 = vsel %vm236, %v378, 0.0
  %v402 = vadd.f32 %v400, %v401
  %v403 = vsel %vm236, %v379, 0.0
  %v404 = vadd.f32 %v402, %v403
  %v405 = vsel %vm236, %v380, 0.0
  %v406 = vadd.f32 %v404, %v405
  %v407 = vsel %vm236, %v381, 0.0
  %v408 = vadd.f32 %v406, %v407
  %v409 = vsel %vm236, %v382, 0.0
  %v410 = vadd.f32 %v408, %v409
  %v411 = vsel %vm236, %v383, 0.0
  %v412 = vadd.f32 %v410, %v411
  %v413 = vsel %vm236, %v384, 0.0
  %v414 = vadd.f32 %v412, %v413
  %v415 = vsel %vm236, %v385, 0.0
  %v416 = vadd.f32 %v414, %v415
  %v417 = vrot.slane %v416, 4
  %v418 = vadd.f32 %v416, %v417
  %v419 = vrot.slane %v418, 2
  %v420 = vadd.f32 %v418, %v419
  %v421 = vrot.slane %v420, 1
  %v422 = vadd.f32 %v420, %v421
  %v424 = vsel %vm236, %v422, 0
  %426 = vmatprep.subr.mxu0 0.0
  %427 = vmatpush1.msra.mxu0 %v274
  %428 = vmatprep.subr.mxu0 0.0
  %429 = vmatpush1.msra.mxu0 %v275
  %430 = vmatprep.subr.mxu0 0.0
  %431 = vmatpush1.msra.mxu0 0.0
  %432 = vmatprep.subr.mxu0 0.0
  %433 = vmatpush1.msra.mxu0 0.0
  %434 = vmatprep.subr.mxu0 0.0
  %435 = vmatpush1.msra.mxu0 0.0
  %436 = vmatprep.subr.mxu0 0.0
  %437 = vmatpush1.msra.mxu0 0.0
  %438 = vmatprep.subr.mxu0 0.0
  %439 = vmatpush1.msra.mxu0 0.0
  %440 = vmatprep.subr.mxu0 0.0
  %441 = vmatpush1.msra.mxu0 0.0
  %442 = vmatprep.subr.mxu0 0.0
  %443 = vmatpush1.msra.mxu0 0.0
  %444 = vmatprep.subr.mxu0 0.0
  %445 = vmatpush1.msra.mxu0 0.0
  %446 = vmatprep.subr.mxu0 0.0
  %447 = vmatpush1.msra.mxu0 0.0
  %448 = vmatprep.subr.mxu0 0.0
  %449 = vmatpush1.msra.mxu0 0.0
  %450 = vmatprep.subr.mxu0 0.0
  %451 = vmatpush1.msra.mxu0 0.0
  %452 = vmatprep.subr.mxu0 0.0
  %453 = vmatpush1.msra.mxu0 0.0
  %454 = vmatprep.subr.mxu0 0.0
  %455 = vmatpush1.msra.mxu0 0.0
  %456 = vmatprep.subr.mxu0 0.0
  %457 = vmatpush1.msra.mxu0 0.0
  %458 = vmatprep.subr.mxu0 0.0
  %459 = vmatpush1.msra.mxu0 0.0
  %460 = vmatprep.subr.mxu0 0.0
  %461 = vmatpush1.msra.mxu0 0.0
  %462 = vmatprep.subr.mxu0 0.0
  %463 = vmatpush1.msra.mxu0 0.0
  %464 = vmatprep.subr.mxu0 0.0
  %465 = vmatpush1.msra.mxu0 0.0
  %466 = vmatprep.subr.mxu0 0.0
  %467 = vmatpush1.msra.mxu0 0.0
  %468 = vmatprep.subr.mxu0 0.0
  %469 = vmatpush1.msra.mxu0 0.0
  %470 = vmatprep.subr.mxu0 0.0
  %471 = vmatpush1.msra.mxu0 0.0
  %472 = vmatprep.subr.mxu0 0.0
  %473 = vmatpush1.msra.mxu0 0.0
  %474 = vmatprep.subr.mxu0 0.0
  %475 = vmatpush1.msra.mxu0 0.0
  %476 = vmatprep.subr.mxu0 0.0
  %477 = vmatpush1.msra.mxu0 0.0
  %478 = vmatprep.subr.mxu0 0.0
  %479 = vmatpush1.msra.mxu0 0.0
  %480 = vmatprep.subr.mxu0 0.0
  %481 = vmatpush1.msra.mxu0 0.0
  %482 = vmatprep.subr.mxu0 0.0
  %483 = vmatpush1.msra.mxu0 0.0
  %484 = vmatprep.subr.mxu0 0.0
  %485 = vmatpush1.msra.mxu0 0.0
  %486 = vmatprep.subr.mxu0 0.0
  %487 = vmatpush1.msra.mxu0 0.0
  %488 = vmatprep.subr.mxu0 0.0
  %489 = vmatpush1.msra.mxu0 0.0
  %490 = vmatprep.mubr.f32.mxu0 0.0
  %491 = vmatmul.mubr.f32.gmra.mrb[0].mxu0 %v424
  %v492 = vpop.f32.mrb[0].mxu0
  %v493 = vadd.f32 0.0, %v492
  %v494 = vpop.f32.mrb[0].mxu0
  %495 = vdwg.mxu0
  %v496 = vmul.f32 %v493, 0.001953125
  %v497 = vadd.f32 %v496, 1e-05
  %v498 = vrsqrt.pop %v497
  %v499 = vlaneseq
  %v500 = vshrl.u32 %v499, 7
  %v501 = vsub.s32 0, %v500
  %v502 = vrot.slane %v498, %v501
  %v503 = vmul.f32 %v354, %v502
  %v504 = vmul.f32 %v355, %v502
  %v505 = vmul.f32 %v356, %v502
  %v506 = vmul.f32 %v357, %v502
  %v507 = vmul.f32 %v358, %v502
  %v508 = vmul.f32 %v359, %v502
  %v509 = vmul.f32 %v360, %v502
  %v510 = vmul.f32 %v361, %v502
  %v511 = vmul.f32 %v362, %v502
  %v512 = vmul.f32 %v363, %v502
  %v513 = vmul.f32 %v364, %v502
  %v514 = vmul.f32 %v365, %v502
  %v515 = vmul.f32 %v366, %v502
  %v516 = vmul.f32 %v367, %v502
  %v517 = vmul.f32 %v368, %v502
  %v518 = vmul.f32 %v369, %v502
  %v519 = vld [vmem:[%s3] sm:$0x1]
  %v520 = vlaneseq
  %v521 = vshrl.u32 %v520, 7
  %v522 = vsub.s32 0, %v521
  %v523 = vrot.slane %v519, %v522
  %v524 = vmul.f32 %v503, %v523
  %v525 = vmul.f32 %v504, %v523
  %v526 = vmul.f32 %v505, %v523
  %v527 = vmul.f32 %v506, %v523
  %v528 = vmul.f32 %v507, %v523
  %v529 = vmul.f32 %v508, %v523
  %v530 = vmul.f32 %v509, %v523
  %v531 = vmul.f32 %v510, %v523
  %v532 = vmul.f32 %v511, %v523
  %v533 = vmul.f32 %v512, %v523
  %v534 = vmul.f32 %v513, %v523
  %v535 = vmul.f32 %v514, %v523
  %v536 = vmul.f32 %v515, %v523
  %v537 = vmul.f32 %v516, %v523
  %v538 = vmul.f32 %v517, %v523
  %v539 = vmul.f32 %v518, %v523
  %v540 = vld [vmem:[%s3 + $0x1] sm:$0x1]
  %v541 = vlaneseq
  %v542 = vshrl.u32 %v541, 7
  %v543 = vsub.s32 0, %v542
  %v544 = vrot.slane %v540, %v543
  %v545 = vadd.f32 %v524, %v544
  %v546 = vadd.f32 %v525, %v544
  %v547 = vadd.f32 %v526, %v544
  %v548 = vadd.f32 %v527, %v544
  %v549 = vadd.f32 %v528, %v544
  %v550 = vadd.f32 %v529, %v544
  %v551 = vadd.f32 %v530, %v544
  %v552 = vadd.f32 %v531, %v544
  %v553 = vadd.f32 %v532, %v544
  %v554 = vadd.f32 %v533, %v544
  %v555 = vadd.f32 %v534, %v544
  %v556 = vadd.f32 %v535, %v544
  %v557 = vadd.f32 %v536, %v544
  %v558 = vadd.f32 %v537, %v544
  %v559 = vadd.f32 %v538, %v544
  %v560 = vadd.f32 %v539, %v544
  %v561 = vmax.f32 %v545, 0.0
  %v562 = vmax.f32 %v546, 0.0
  %v563 = vmax.f32 %v547, 0.0
  %v564 = vmax.f32 %v548, 0.0
  %v565 = vmax.f32 %v549, 0.0
  %v566 = vmax.f32 %v550, 0.0
  %v567 = vmax.f32 %v551, 0.0
  %v568 = vmax.f32 %v552, 0.0
  %v569 = vmax.f32 %v553, 0.0
  %v570 = vmax.f32 %v554, 0.0
  %v571 = vmax.f32 %v555, 0.0
  %v572 = vmax.f32 %v556, 0.0
  %v573 = vmax.f32 %v557, 0.0
  %v574 = vmax.f32 %v558, 0.0
  %v575 = vmax.f32 %v559, 0.0
  %v576 = vmax.f32 %v560, 0.0
  %577 = vst.msk [vmem:[%s4] sm:$0xff] %vm236, %v561
  %578 = vst.msk [vmem:[%s4 + $0x8] sm:$0xff] %vm236, %v562
  %579 = vst.msk [vmem:[%s4 + $0x10] sm:$0xff] %vm236, %v563
  %580 = vst.msk [vmem:[%s4 + $0x18] sm:$0xff] %vm236, %v564
  %581 = vst.msk [vmem:[%s4 + $0x20] sm:$0xff] %vm236, %v565
  %582 = vst.msk [vmem:[%s4 + $0x28] sm:$0xff] %vm236, %v566
  %583 = vst.msk [vmem:[%s4 + $0x30] sm:$0xff] %vm236, %v567
  %584 = vst.msk [vmem:[%s4 + $0x38] sm:$0xff] %vm236, %v568
  %585 = vst.msk [vmem:[%s4 + $0x40] sm:$0xff] %vm236, %v569
  %586 = vst.msk [vmem:[%s4 + $0x48] sm:$0xff] %vm236, %v570
  %587 = vst.msk [vmem:[%s4 + $0x50] sm:$0xff] %vm236, %v571
  %588 = vst.msk [vmem:[%s4 + $0x58] sm:$0xff] %vm236, %v572
  %589 = vst.msk [vmem:[%s4 + $0x60] sm:$0xff] %vm236, %v573
  %590 = vst.msk [vmem:[%s4 + $0x68] sm:$0xff] %vm236, %v574
  %591 = vst.msk [vmem:[%s4 + $0x70] sm:$0xff] %vm236, %v575
  %592 = vst.msk [vmem:[%s4 + $0x78] sm:$0xff] %vm236, %v576
  // Predicated region
  $region18: #{generator_forward.6} parent=0 // pred_check
    _
  $region19: #{generator_forward.6} parent=0 // pred_check_branch
    %594 = sbr.rel (0) target = $region21
  $region20: #{generator_forward.6} parent=0 // pred_region
    _
  $region21: #{generator_forward.6} parent=0 // pred_fallthru
    _
  // Predicated region
  $region22: #{generator_forward.6} parent=0 // pred_check
    _
  $region23: #{generator_forward.6} parent=0 // pred_check_branch
    %596 = sbr.rel (0) target = $region25
  $region24: #{generator_forward.6} parent=0 // pred_region
    _
  $region25: #{generator_forward.6} parent=0 // pred_fallthru
    _

// kernel: generator_forward.7
$region0: #{generator_forward.7}
  #allocation0 [shape = 'u32[]', space=smem, size = 0x4, offset = 0x4, fixed_abs, tag = 'smem constant byte address 0x4 - core index']
  #allocation1 [shape = 'u32[144,128]{1,0:T(1,128)}', space=vmem, size = 0x12000, scoped, tag = 'internal scratch']
  %s0 = inlined_call_operand.vmem [shape: f32[512,36], index: 0, kind: input, shape index: {}]
  %s1 = inlined_call_operand.vmem [shape: f32[36,12], index: 1, kind: input, shape index: {}]
  %s2 = inlined_call_operand.vmem [shape: f32[512,12], index: 2, kind: output, shape index: {}]
  %s3 = sld [smem:[#allocation0]]
  $region18: #{generator_forward.7} parent=0
    _
  %s5 = ssub.s32 1, %s3
  %s6 = scalar_select 0, %s5, %s3
  // Predicated region
  $region2: #{generator_forward.7} parent=0 // pred_check
    _
  $region3: #{generator_forward.7} parent=0 // pred_check_branch
    %8 = sbr.rel (0) target = $region5
  $region4: #{generator_forward.7} parent=0 // pred_region
    _
  $region5: #{generator_forward.7} parent=0 // pred_fallthru
    _
  // Predicated region
  $region6: #{generator_forward.7} parent=0 // pred_check
    _
  $region7: #{generator_forward.7} parent=0 // pred_check_branch
    %10 = sbr.rel (0) target = $region9
  $region8: #{generator_forward.7} parent=0 // pred_region
    _
  $region9: #{generator_forward.7} parent=0 // pred_fallthru
    _
  %v11 = vld [vmem:[%s0] sm:$0xff]
  %v12 = vld [vmem:[%s0 + $0x8] sm:$0xff]
  %v13 = vld [vmem:[%s0 + $0x10] sm:$0xff]
  %v14 = vld [vmem:[%s0 + $0x18] sm:$0xff]
  %v15 = vld [vmem:[%s0 + $0x20] sm:$0xff]
  %v16 = vld [vmem:[%s0 + $0x28] sm:$0xff]
  %v17 = vld [vmem:[%s0 + $0x30] sm:$0xff]
  %v18 = vld [vmem:[%s0 + $0x38] sm:$0xff]
  %v19 = vld [vmem:[%s0 + $0x40] sm:$0xff]
  %v20 = vld [vmem:[%s0 + $0x48] sm:$0xff]
  %v21 = vld [vmem:[%s0 + $0x50] sm:$0xff]
  %v22 = vld [vmem:[%s0 + $0x58] sm:$0xff]
  %v23 = vld [vmem:[%s0 + $0x60] sm:$0xff]
  %v24 = vld [vmem:[%s0 + $0x68] sm:$0xff]
  %v25 = vld [vmem:[%s0 + $0x70] sm:$0xff]
  %v26 = vld [vmem:[%s0 + $0x78] sm:$0xff]
  %v27 = vld [vmem:[%s0 + $0x80] sm:$0xff]
  %v28 = vld [vmem:[%s0 + $0x88] sm:$0xff]
  %v29 = vld [vmem:[%s0 + $0x90] sm:$0xff]
  %v30 = vld [vmem:[%s0 + $0x98] sm:$0xff]
  %v31 = vld [vmem:[%s0 + $0xa0] sm:$0xff]
  %v32 = vld [vmem:[%s0 + $0xa8] sm:$0xff]
  %v33 = vld [vmem:[%s0 + $0xb0] sm:$0xff]
  %v34 = vld [vmem:[%s0 + $0xb8] sm:$0xff]
  %v35 = vld [vmem:[%s0 + $0xc0] sm:$0xff]
  %v36 = vld [vmem:[%s0 + $0xc8] sm:$0xff]
  %v37 = vld [vmem:[%s0 + $0xd0] sm:$0xff]
  %v38 = vld [vmem:[%s0 + $0xd8] sm:$0xff]
  %v39 = vld [vmem:[%s0 + $0xe0] sm:$0xff]
  %v40 = vld [vmem:[%s0 + $0xe8] sm:$0xff]
  %v41 = vld [vmem:[%s0 + $0xf0] sm:$0xff]
  %v42 = vld [vmem:[%s0 + $0xf8] sm:$0xff]
  %v43 = vld [vmem:[%s0 + $0x100] sm:$0xff]
  %v44 = vld [vmem:[%s0 + $0x108] sm:$0xff]
  %v45 = vld [vmem:[%s0 + $0x110] sm:$0xff]
  %v46 = vld [vmem:[%s0 + $0x118] sm:$0xff]
  %v47 = vld [vmem:[%s0 + $0x120] sm:$0xff]
  %v48 = vld [vmem:[%s0 + $0x128] sm:$0xff]
  %v49 = vld [vmem:[%s0 + $0x130] sm:$0xff]
  %v50 = vld [vmem:[%s0 + $0x138] sm:$0xff]
  %v51 = vld [vmem:[%s0 + $0x140] sm:$0xff]
  %v52 = vld [vmem:[%s0 + $0x148] sm:$0xff]
  %v53 = vld [vmem:[%s0 + $0x150] sm:$0xff]
  %v54 = vld [vmem:[%s0 + $0x158] sm:$0xff]
  %v55 = vld [vmem:[%s0 + $0x160] sm:$0xff]
  %v56 = vld [vmem:[%s0 + $0x168] sm:$0xff]
  %v57 = vld [vmem:[%s0 + $0x170] sm:$0xff]
  %v58 = vld [vmem:[%s0 + $0x178] sm:$0xff]
  %v59 = vld [vmem:[%s0 + $0x180] sm:$0xff]
  %v60 = vld [vmem:[%s0 + $0x188] sm:$0xff]
  %v61 = vld [vmem:[%s0 + $0x190] sm:$0xff]
  %v62 = vld [vmem:[%s0 + $0x198] sm:$0xff]
  %v63 = vld [vmem:[%s0 + $0x1a0] sm:$0xff]
  %v64 = vld [vmem:[%s0 + $0x1a8] sm:$0xff]
  %v65 = vld [vmem:[%s0 + $0x1b0] sm:$0xff]
  %v66 = vld [vmem:[%s0 + $0x1b8] sm:$0xff]
  %v67 = vld [vmem:[%s0 + $0x1c0] sm:$0xff]
  %v68 = vld [vmem:[%s0 + $0x1c8] sm:$0xff]
  %v69 = vld [vmem:[%s0 + $0x1d0] sm:$0xff]
  %v70 = vld [vmem:[%s0 + $0x1d8] sm:$0xff]
  %v71 = vld [vmem:[%s0 + $0x1e0] sm:$0xff]
  %v72 = vld [vmem:[%s0 + $0x1e8] sm:$0xff]
  %v73 = vld [vmem:[%s0 + $0x1f0] sm:$0xff]
  %v74 = vld [vmem:[%s0 + $0x1f8] sm:$0xff]
  %v75 = vld [vmem:[%s1] sm:$0xff]
  %v76 = vld [vmem:[%s1 + $0x8] sm:$0xff]
  %v77 = vld [vmem:[%s1 + $0x10] sm:$0xff]
  %v78 = vld [vmem:[%s1 + $0x18] sm:$0xff]
  %v79 = vld [vmem:[%s1 + $0x20] sm:$0xf]
  %vm80 = vcmask 293888
  %v82 = vsel %vm80, %v11, 0
  %v85 = vsel %vm80, %v12, 0
  %v88 = vsel %vm80, %v13, 0
  %v91 = vsel %vm80, %v14, 0
  %v94 = vsel %vm80, %v15, 0
  %v97 = vsel %vm80, %v16, 0
  %v100 = vsel %vm80, %v17, 0
  %v103 = vsel %vm80, %v18, 0
  %v106 = vsel %vm80, %v19, 0
  %v109 = vsel %vm80, %v20, 0
  %v112 = vsel %vm80, %v21, 0
  %v115 = vsel %vm80, %v22, 0
  %v118 = vsel %vm80, %v23, 0
  %v121 = vsel %vm80, %v24, 0
  %v124 = vsel %vm80, %v25, 0
  %v127 = vsel %vm80, %v26, 0
  %v130 = vsel %vm80, %v27, 0
  %v133 = vsel %vm80, %v28, 0
  %v136 = vsel %vm80, %v29, 0
  %v139 = vsel %vm80, %v30, 0
  %v142 = vsel %vm80, %v31, 0
  %v145 = vsel %vm80, %v32, 0
  %v148 = vsel %vm80, %v33, 0
  %v151 = vsel %vm80, %v34, 0
  %v154 = vsel %vm80, %v35, 0
  %v157 = vsel %vm80, %v36, 0
  %v160 = vsel %vm80, %v37, 0
  %v163 = vsel %vm80, %v38, 0
  %v166 = vsel %vm80, %v39, 0
  %v169 = vsel %vm80, %v40, 0
  %v172 = vsel %vm80, %v41, 0
  %v175 = vsel %vm80, %v42, 0
  %v178 = vsel %vm80, %v43, 0
  %v181 = vsel %vm80, %v44, 0
  %v184 = vsel %vm80, %v45, 0
  %v187 = vsel %vm80, %v46, 0
  %v190 = vsel %vm80, %v47, 0
  %v193 = vsel %vm80, %v48, 0
  %v196 = vsel %vm80, %v49, 0
  %v199 = vsel %vm80, %v50, 0
  %v202 = vsel %vm80, %v51, 0
  %v205 = vsel %vm80, %v52, 0
  %v208 = vsel %vm80, %v53, 0
  %v211 = vsel %vm80, %v54, 0
  %v214 = vsel %vm80, %v55, 0
  %v217 = vsel %vm80, %v56, 0
  %v220 = vsel %vm80, %v57, 0
  %v223 = vsel %vm80, %v58, 0
  %v226 = vsel %vm80, %v59, 0
  %v229 = vsel %vm80, %v60, 0
  %v232 = vsel %vm80, %v61, 0
  %v235 = vsel %vm80, %v62, 0
  %v238 = vsel %vm80, %v63, 0
  %v241 = vsel %vm80, %v64, 0
  %v244 = vsel %vm80, %v65, 0
  %v247 = vsel %vm80, %v66, 0
  %v250 = vsel %vm80, %v67, 0
  %v253 = vsel %vm80, %v68, 0
  %v256 = vsel %vm80, %v69, 0
  %v259 = vsel %vm80, %v70, 0
  %v262 = vsel %vm80, %v71, 0
  %v265 = vsel %vm80, %v72, 0
  %v268 = vsel %vm80, %v73, 0
  %v271 = vsel %vm80, %v74, 0
  %vm273 = vcmask 1043456
  %v275 = vsel %vm273, %v79, 0
  %277 = vmatprep.subr.mxu0 0.0
  %278 = vmatpush1.msra.mxu0 %v75
  %279 = vmatprep.subr.mxu0 0.0
  %280 = vmatpush1.msra.mxu0 %v76
  %281 = vmatprep.subr.mxu0 0.0
  %282 = vmatpush1.msra.mxu0 %v77
  %283 = vmatprep.subr.mxu0 0.0
  %284 = vmatpush1.msra.mxu0 %v78
  %285 = vmatprep.subr.mxu0 0.0
  %286 = vmatpush1.msra.mxu0 %v275
  %287 = vmatprep.subr.mxu0 0.0
  %288 = vmatpush1.msra.mxu0 0.0
  %289 = vmatprep.subr.mxu0 0.0
  %290 = vmatpush1.msra.mxu0 0.0
  %291 = vmatprep.subr.mxu0 0.0
  %292 = vmatpush1.msra.mxu0 0.0
  %293 = vmatprep.subr.mxu0 0.0
  %294 = vmatpush1.msra.mxu0 0.0
  %295 = vmatprep.subr.mxu0 0.0
  %296 = vmatpush1.msra.mxu0 0.0
  %297 = vmatprep.subr.mxu0 0.0
  %298 = vmatpush1.msra.mxu0 0.0
  %299 = vmatprep.subr.mxu0 0.0
  %300 = vmatpush1.msra.mxu0 0.0
  %301 = vmatprep.subr.mxu0 0.0
  %302 = vmatpush1.msra.mxu0 0.0
  %303 = vmatprep.subr.mxu0 0.0
  %304 = vmatpush1.msra.mxu0 0.0
  %305 = vmatprep.subr.mxu0 0.0
  %306 = vmatpush1.msra.mxu0 0.0
  %307 = vmatprep.subr.mxu0 0.0
  %308 = vmatpush1.msra.mxu0 0.0
  %309 = vmatprep.subr.mxu0 0.0
  %310 = vmatpush1.msra.mxu0 0.0
  %311 = vmatprep.subr.mxu0 0.0
  %312 = vmatpush1.msra.mxu0 0.0
  %313 = vmatprep.subr.mxu0 0.0
  %314 = vmatpush1.msra.mxu0 0.0
  %315 = vmatprep.subr.mxu0 0.0
  %316 = vmatpush1.msra.mxu0 0.0
  %317 = vmatprep.subr.mxu0 0.0
  %318 = vmatpush1.msra.mxu0 0.0
  %319 = vmatprep.subr.mxu0 0.0
  %320 = vmatpush1.msra.mxu0 0.0
  %321 = vmatprep.subr.mxu0 0.0
  %322 = vmatpush1.msra.mxu0 0.0
  %323 = vmatprep.subr.mxu0 0.0
  %324 = vmatpush1.msra.mxu0 0.0
  %325 = vmatprep.subr.mxu0 0.0
  %326 = vmatpush1.msra.mxu0 0.0
  %327 = vmatprep.subr.mxu0 0.0
  %328 = vmatpush1.msra.mxu0 0.0
  %329 = vmatprep.subr.mxu0 0.0
  %330 = vmatpush1.msra.mxu0 0.0
  %331 = vmatprep.subr.mxu0 0.0
  %332 = vmatpush1.msra.mxu0 0.0
  %333 = vmatprep.subr.mxu0 0.0
  %334 = vmatpush1.msra.mxu0 0.0
  %335 = vmatprep.subr.mxu0 0.0
  %336 = vmatpush1.msra.mxu0 0.0
  %337 = vmatprep.subr.mxu0 0.0
  %338 = vmatpush1.msra.mxu0 0.0
  %339 = vmatprep.subr.mxu0 0.0
  %340 = vmatpush1.msra.mxu0 0.0
  %341 = vmatprep.mubr.f32.mxu0 0.0
  %342 = vmatmul.mubr.f32.gmra.mrb[0].mxu0 %v82
  %v343 = vpop.f32.mrb[0].mxu0
  %v344 = vadd.f32 0.0, %v343
  %v345 = vpop.f32.mrb[0].mxu0
  %346 = vmatprep.mubr.f32.mxu0 0.0
  %347 = vmatmul.mubr.f32.gmra.mrb[0].mxu0 %v85
  %v348 = vpop.f32.mrb[0].mxu0
  %v349 = vadd.f32 0.0, %v348
  %v350 = vpop.f32.mrb[0].mxu0
  %351 = vmatprep.mubr.f32.mxu0 0.0
  %352 = vmatmul.mubr.f32.gmra.mrb[0].mxu0 %v88
  %v353 = vpop.f32.mrb[0].mxu0
  %v354 = vadd.f32 0.0, %v353
  %v355 = vpop.f32.mrb[0].mxu0
  %356 = vmatprep.mubr.f32.mxu0 0.0
  %357 = vmatmul.mubr.f32.gmra.mrb[0].mxu0 %v91
  %v358 = vpop.f32.mrb[0].mxu0
  %v359 = vadd.f32 0.0, %v358
  %v360 = vpop.f32.mrb[0].mxu0
  %361 = vmatprep.mubr.f32.mxu0 0.0
  %362 = vmatmul.mubr.f32.gmra.mrb[0].mxu0 %v94
  %v363 = vpop.f32.mrb[0].mxu0
  %v364 = vadd.f32 0.0, %v363
  %v365 = vpop.f32.mrb[0].mxu0
  %366 = vmatprep.mubr.f32.mxu0 0.0
  %367 = vmatmul.mubr.f32.gmra.mrb[0].mxu0 %v97
  %v368 = vpop.f32.mrb[0].mxu0
  %v369 = vadd.f32 0.0, %v368
  %v370 = vpop.f32.mrb[0].mxu0
  %371 = vmatprep.mubr.f32.mxu0 0.0
  %372 = vmatmul.mubr.f32.gmra.mrb[0].mxu0 %v100
  %v373 = vpop.f32.mrb[0].mxu0
  %v374 = vadd.f32 0.0, %v373
  %v375 = vpop.f32.mrb[0].mxu0
  %376 = vmatprep.mubr.f32.mxu0 0.0
  %377 = vmatmul.mubr.f32.gmra.mrb[0].mxu0 %v103
  %v378 = vpop.f32.mrb[0].mxu0
  %v379 = vadd.f32 0.0, %v378
  %v380 = vpop.f32.mrb[0].mxu0
  %381 = vmatprep.mubr.f32.mxu0 0.0
  %382 = vmatmul.mubr.f32.gmra.mrb[0].mxu0 %v106
  %v383 = vpop.f32.mrb[0].mxu0
  %v384 = vadd.f32 0.0, %v383
  %v385 = vpop.f32.mrb[0].mxu0
  %386 = vmatprep.mubr.f32.mxu0 0.0
  %387 = vmatmul.mubr.f32.gmra.mrb[0].mxu0 %v109
  %v388 = vpop.f32.mrb[0].mxu0
  %v389 = vadd.f32 0.0, %v388
  %v390 = vpop.f32.mrb[0].mxu0
  %391 = vmatprep.mubr.f32.mxu0 0.0
  %392 = vmatmul.mubr.f32.gmra.mrb[0].mxu0 %v112
  %v393 = vpop.f32.mrb[0].mxu0
  %v394 = vadd.f32 0.0, %v393
  %v395 = vpop.f32.mrb[0].mxu0
  %396 = vmatprep.mubr.f32.mxu0 0.0
  %397 = vmatmul.mubr.f32.gmra.mrb[0].mxu0 %v115
  %v398 = vpop.f32.mrb[0].mxu0
  %v399 = vadd.f32 0.0, %v398
  %v400 = vpop.f32.mrb[0].mxu0
  %401 = vmatprep.mubr.f32.mxu0 0.0
  %402 = vmatmul.mubr.f32.gmra.mrb[0].mxu0 %v118
  %v403 = vpop.f32.mrb[0].mxu0
  %v404 = vadd.f32 0.0, %v403
  %v405 = vpop.f32.mrb[0].mxu0
  %406 = vmatprep.mubr.f32.mxu0 0.0
  %407 = vmatmul.mubr.f32.gmra.mrb[0].mxu0 %v121
  %v408 = vpop.f32.mrb[0].mxu0
  %v409 = vadd.f32 0.0, %v408
  %v410 = vpop.f32.mrb[0].mxu0
  %411 = vmatprep.mubr.f32.mxu0 0.0
  %412 = vmatmul.mubr.f32.gmra.mrb[0].mxu0 %v124
  %v413 = vpop.f32.mrb[0].mxu0
  %v414 = vadd.f32 0.0, %v413
  %v415 = vpop.f32.mrb[0].mxu0
  %416 = vmatprep.mubr.f32.mxu0 0.0
  %417 = vmatmul.mubr.f32.gmra.mrb[0].mxu0 %v127
  %v418 = vpop.f32.mrb[0].mxu0
  %v419 = vadd.f32 0.0, %v418
  %v420 = vpop.f32.mrb[0].mxu0
  %421 = vmatprep.mubr.f32.mxu0 0.0
  %422 = vmatmul.mubr.f32.gmra.mrb[0].mxu0 %v130
  %v423 = vpop.f32.mrb[0].mxu0
  %v424 = vadd.f32 0.0, %v423
  %v425 = vpop.f32.mrb[0].mxu0
  %426 = vmatprep.mubr.f32.mxu0 0.0
  %427 = vmatmul.mubr.f32.gmra.mrb[0].mxu0 %v133
  %v428 = vpop.f32.mrb[0].mxu0
  %v429 = vadd.f32 0.0, %v428
  %v430 = vpop.f32.mrb[0].mxu0
  %431 = vmatprep.mubr.f32.mxu0 0.0
  %432 = vmatmul.mubr.f32.gmra.mrb[0].mxu0 %v136
  %v433 = vpop.f32.mrb[0].mxu0
  %v434 = vadd.f32 0.0, %v433
  %v435 = vpop.f32.mrb[0].mxu0
  %436 = vmatprep.mubr.f32.mxu0 0.0
  %437 = vmatmul.mubr.f32.gmra.mrb[0].mxu0 %v139
  %v438 = vpop.f32.mrb[0].mxu0
  %v439 = vadd.f32 0.0, %v438
  %v440 = vpop.f32.mrb[0].mxu0
  %441 = vmatprep.mubr.f32.mxu0 0.0
  %442 = vmatmul.mubr.f32.gmra.mrb[0].mxu0 %v142
  %v443 = vpop.f32.mrb[0].mxu0
  %v444 = vadd.f32 0.0, %v443
  %v445 = vpop.f32.mrb[0].mxu0
  %446 = vmatprep.mubr.f32.mxu0 0.0
  %447 = vmatmul.mubr.f32.gmra.mrb[0].mxu0 %v145
  %v448 = vpop.f32.mrb[0].mxu0
  %v449 = vadd.f32 0.0, %v448
  %v450 = vpop.f32.mrb[0].mxu0
  %451 = vmatprep.mubr.f32.mxu0 0.0
  %452 = vmatmul.mubr.f32.gmra.mrb[0].mxu0 %v148
  %v453 = vpop.f32.mrb[0].mxu0
  %v454 = vadd.f32 0.0, %v453
  %v455 = vpop.f32.mrb[0].mxu0
  %456 = vmatprep.mubr.f32.mxu0 0.0
  %457 = vmatmul.mubr.f32.gmra.mrb[0].mxu0 %v151
  %v458 = vpop.f32.mrb[0].mxu0
  %v459 = vadd.f32 0.0, %v458
  %v460 = vpop.f32.mrb[0].mxu0
  %461 = vmatprep.mubr.f32.mxu0 0.0
  %462 = vmatmul.mubr.f32.gmra.mrb[0].mxu0 %v154
  %v463 = vpop.f32.mrb[0].mxu0
  %v464 = vadd.f32 0.0, %v463
  %v465 = vpop.f32.mrb[0].mxu0
  %466 = vmatprep.mubr.f32.mxu0 0.0
  %467 = vmatmul.mubr.f32.gmra.mrb[0].mxu0 %v157
  %v468 = vpop.f32.mrb[0].mxu0
  %v469 = vadd.f32 0.0, %v468
  %v470 = vpop.f32.mrb[0].mxu0
  %471 = vmatprep.mubr.f32.mxu0 0.0
  %472 = vmatmul.mubr.f32.gmra.mrb[0].mxu0 %v160
  %v473 = vpop.f32.mrb[0].mxu0
  %v474 = vadd.f32 0.0, %v473
  %v475 = vpop.f32.mrb[0].mxu0
  %476 = vmatprep.mubr.f32.mxu0 0.0
  %477 = vmatmul.mubr.f32.gmra.mrb[0].mxu0 %v163
  %v478 = vpop.f32.mrb[0].mxu0
  %v479 = vadd.f32 0.0, %v478
  %v480 = vpop.f32.mrb[0].mxu0
  %481 = vmatprep.mubr.f32.mxu0 0.0
  %482 = vmatmul.mubr.f32.gmra.mrb[0].mxu0 %v166
  %v483 = vpop.f32.mrb[0].mxu0
  %v484 = vadd.f32 0.0, %v483
  %v485 = vpop.f32.mrb[0].mxu0
  %486 = vmatprep.mubr.f32.mxu0 0.0
  %487 = vmatmul.mubr.f32.gmra.mrb[0].mxu0 %v169
  %v488 = vpop.f32.mrb[0].mxu0
  %v489 = vadd.f32 0.0, %v488
  %v490 = vpop.f32.mrb[0].mxu0
  %491 = vmatprep.mubr.f32.mxu0 0.0
  %492 = vmatmul.mubr.f32.gmra.mrb[0].mxu0 %v172
  %v493 = vpop.f32.mrb[0].mxu0
  %v494 = vadd.f32 0.0, %v493
  %v495 = vpop.f32.mrb[0].mxu0
  %496 = vmatprep.mubr.f32.mxu0 0.0
  %497 = vmatmul.mubr.f32.gmra.mrb[0].mxu0 %v175
  %v498 = vpop.f32.mrb[0].mxu0
  %v499 = vadd.f32 0.0, %v498
  %v500 = vpop.f32.mrb[0].mxu0
  %501 = vmatprep.mubr.f32.mxu0 0.0
  %502 = vmatmul.mubr.f32.gmra.mrb[0].mxu0 %v178
  %v503 = vpop.f32.mrb[0].mxu0
  %v504 = vadd.f32 0.0, %v503
  %v505 = vpop.f32.mrb[0].mxu0
  %506 = vmatprep.mubr.f32.mxu0 0.0
  %507 = vmatmul.mubr.f32.gmra.mrb[0].mxu0 %v181
  %v508 = vpop.f32.mrb[0].mxu0
  %v509 = vadd.f32 0.0, %v508
  %v510 = vpop.f32.mrb[0].mxu0
  %511 = vmatprep.mubr.f32.mxu0 0.0
  %512 = vmatmul.mubr.f32.gmra.mrb[0].mxu0 %v184
  %v513 = vpop.f32.mrb[0].mxu0
  %v514 = vadd.f32 0.0, %v513
  %v515 = vpop.f32.mrb[0].mxu0
  %516 = vmatprep.mubr.f32.mxu0 0.0
  %517 = vmatmul.mubr.f32.gmra.mrb[0].mxu0 %v187
  %v518 = vpop.f32.mrb[0].mxu0
  %v519 = vadd.f32 0.0, %v518
  %v520 = vpop.f32.mrb[0].mxu0
  %521 = vmatprep.mubr.f32.mxu0 0.0
  %522 = vmatmul.mubr.f32.gmra.mrb[0].mxu0 %v190
  %v523 = vpop.f32.mrb[0].mxu0
  %v524 = vadd.f32 0.0, %v523
  %v525 = vpop.f32.mrb[0].mxu0
  %526 = vmatprep.mubr.f32.mxu0 0.0
  %527 = vmatmul.mubr.f32.gmra.mrb[0].mxu0 %v193
  %v528 = vpop.f32.mrb[0].mxu0
  %v529 = vadd.f32 0.0, %v528
  %v530 = vpop.f32.mrb[0].mxu0
  %531 = vmatprep.mubr.f32.mxu0 0.0
  %532 = vmatmul.mubr.f32.gmra.mrb[0].mxu0 %v196
  %v533 = vpop.f32.mrb[0].mxu0
  %v534 = vadd.f32 0.0, %v533
  %v535 = vpop.f32.mrb[0].mxu0
  %536 = vmatprep.mubr.f32.mxu0 0.0
  %537 = vmatmul.mubr.f32.gmra.mrb[0].mxu0 %v199
  %v538 = vpop.f32.mrb[0].mxu0
  %v539 = vadd.f32 0.0, %v538
  %v540 = vpop.f32.mrb[0].mxu0
  %541 = vmatprep.mubr.f32.mxu0 0.0
  %542 = vmatmul.mubr.f32.gmra.mrb[0].mxu0 %v202
  %v543 = vpop.f32.mrb[0].mxu0
  %v544 = vadd.f32 0.0, %v543
  %v545 = vpop.f32.mrb[0].mxu0
  %546 = vmatprep.mubr.f32.mxu0 0.0
  %547 = vmatmul.mubr.f32.gmra.mrb[0].mxu0 %v205
  %v548 = vpop.f32.mrb[0].mxu0
  %v549 = vadd.f32 0.0, %v548
  %v550 = vpop.f32.mrb[0].mxu0
  %551 = vmatprep.mubr.f32.mxu0 0.0
  %552 = vmatmul.mubr.f32.gmra.mrb[0].mxu0 %v208
  %v553 = vpop.f32.mrb[0].mxu0
  %v554 = vadd.f32 0.0, %v553
  %v555 = vpop.f32.mrb[0].mxu0
  %556 = vmatprep.mubr.f32.mxu0 0.0
  %557 = vmatmul.mubr.f32.gmra.mrb[0].mxu0 %v211
  %v558 = vpop.f32.mrb[0].mxu0
  %v559 = vadd.f32 0.0, %v558
  %v560 = vpop.f32.mrb[0].mxu0
  %561 = vmatprep.mubr.f32.mxu0 0.0
  %562 = vmatmul.mubr.f32.gmra.mrb[0].mxu0 %v214
  %v563 = vpop.f32.mrb[0].mxu0
  %v564 = vadd.f32 0.0, %v563
  %v565 = vpop.f32.mrb[0].mxu0
  %566 = vmatprep.mubr.f32.mxu0 0.0
  %567 = vmatmul.mubr.f32.gmra.mrb[0].mxu0 %v217
  %v568 = vpop.f32.mrb[0].mxu0
  %v569 = vadd.f32 0.0, %v568
  %v570 = vpop.f32.mrb[0].mxu0
  %571 = vmatprep.mubr.f32.mxu0 0.0
  %572 = vmatmul.mubr.f32.gmra.mrb[0].mxu0 %v220
  %v573 = vpop.f32.mrb[0].mxu0
  %v574 = vadd.f32 0.0, %v573
  %v575 = vpop.f32.mrb[0].mxu0
  %576 = vmatprep.mubr.f32.mxu0 0.0
  %577 = vmatmul.mubr.f32.gmra.mrb[0].mxu0 %v223
  %v578 = vpop.f32.mrb[0].mxu0
  %v579 = vadd.f32 0.0, %v578
  %v580 = vpop.f32.mrb[0].mxu0
  %581 = vmatprep.mubr.f32.mxu0 0.0
  %582 = vmatmul.mubr.f32.gmra.mrb[0].mxu0 %v226
  %v583 = vpop.f32.mrb[0].mxu0
  %v584 = vadd.f32 0.0, %v583
  %v585 = vpop.f32.mrb[0].mxu0
  %586 = vmatprep.mubr.f32.mxu0 0.0
  %587 = vmatmul.mubr.f32.gmra.mrb[0].mxu0 %v229
  %v588 = vpop.f32.mrb[0].mxu0
  %v589 = vadd.f32 0.0, %v588
  %v590 = vpop.f32.mrb[0].mxu0
  %591 = vmatprep.mubr.f32.mxu0 0.0
  %592 = vmatmul.mubr.f32.gmra.mrb[0].mxu0 %v232
  %v593 = vpop.f32.mrb[0].mxu0
  %v594 = vadd.f32 0.0, %v593
  %v595 = vpop.f32.mrb[0].mxu0
  %596 = vmatprep.mubr.f32.mxu0 0.0
  %597 = vmatmul.mubr.f32.gmra.mrb[0].mxu0 %v235
  %v598 = vpop.f32.mrb[0].mxu0
  %v599 = vadd.f32 0.0, %v598
  %v600 = vpop.f32.mrb[0].mxu0
  %601 = vmatprep.mubr.f32.mxu0 0.0
  %602 = vmatmul.mubr.f32.gmra.mrb[0].mxu0 %v238
  %v603 = vpop.f32.mrb[0].mxu0
  %v604 = vadd.f32 0.0, %v603
  %v605 = vpop.f32.mrb[0].mxu0
  %606 = vmatprep.mubr.f32.mxu0 0.0
  %607 = vmatmul.mubr.f32.gmra.mrb[0].mxu0 %v241
  %v608 = vpop.f32.mrb[0].mxu0
  %v609 = vadd.f32 0.0, %v608
  %v610 = vpop.f32.mrb[0].mxu0
  %611 = vmatprep.mubr.f32.mxu0 0.0
  %612 = vmatmul.mubr.f32.gmra.mrb[0].mxu0 %v244
  %v613 = vpop.f32.mrb[0].mxu0
  %v614 = vadd.f32 0.0, %v613
  %v615 = vpop.f32.mrb[0].mxu0
  %616 = vmatprep.mubr.f32.mxu0 0.0
  %617 = vmatmul.mubr.f32.gmra.mrb[0].mxu0 %v247
  %v618 = vpop.f32.mrb[0].mxu0
  %v619 = vadd.f32 0.0, %v618
  %v620 = vpop.f32.mrb[0].mxu0
  %621 = vmatprep.mubr.f32.mxu0 0.0
  %622 = vmatmul.mubr.f32.gmra.mrb[0].mxu0 %v250
  %v623 = vpop.f32.mrb[0].mxu0
  %v624 = vadd.f32 0.0, %v623
  %v625 = vpop.f32.mrb[0].mxu0
  %626 = vmatprep.mubr.f32.mxu0 0.0
  %627 = vmatmul.mubr.f32.gmra.mrb[0].mxu0 %v253
  %v628 = vpop.f32.mrb[0].mxu0
  %v629 = vadd.f32 0.0, %v628
  %v630 = vpop.f32.mrb[0].mxu0
  %631 = vmatprep.mubr.f32.mxu0 0.0
  %632 = vmatmul.mubr.f32.gmra.mrb[0].mxu0 %v256
  %v633 = vpop.f32.mrb[0].mxu0
  %v634 = vadd.f32 0.0, %v633
  %v635 = vpop.f32.mrb[0].mxu0
  %636 = vmatprep.mubr.f32.mxu0 0.0
  %637 = vmatmul.mubr.f32.gmra.mrb[0].mxu0 %v259
  %v638 = vpop.f32.mrb[0].mxu0
  %v639 = vadd.f32 0.0, %v638
  %v640 = vpop.f32.mrb[0].mxu0
  %641 = vmatprep.mubr.f32.mxu0 0.0
  %642 = vmatmul.mubr.f32.gmra.mrb[0].mxu0 %v262
  %v643 = vpop.f32.mrb[0].mxu0
  %v644 = vadd.f32 0.0, %v643
  %v645 = vpop.f32.mrb[0].mxu0
  %646 = vmatprep.mubr.f32.mxu0 0.0
  %647 = vmatmul.mubr.f32.gmra.mrb[0].mxu0 %v265
  %v648 = vpop.f32.mrb[0].mxu0
  %v649 = vadd.f32 0.0, %v648
  %v650 = vpop.f32.mrb[0].mxu0
  %651 = vmatprep.mubr.f32.mxu0 0.0
  %652 = vmatmul.mubr.f32.gmra.mrb[0].mxu0 %v268
  %v653 = vpop.f32.mrb[0].mxu0
  %v654 = vadd.f32 0.0, %v653
  %v655 = vpop.f32.mrb[0].mxu0
  %656 = vmatprep.mubr.f32.mxu0 0.0
  %657 = vmatmul.mubr.f32.gmra.mrb[0].mxu0 %v271
  %v658 = vpop.f32.mrb[0].mxu0
  %v659 = vadd.f32 0.0, %v658
  %v660 = vpop.f32.mrb[0].mxu0
  %661 = vdwg.mxu0
  %v662 = vxor.u32 %v344, 2147483648
  %v663 = vxor.u32 %v349, 2147483648
  %v664 = vxor.u32 %v354, 2147483648
  %v665 = vxor.u32 %v359, 2147483648
  %v666 = vxor.u32 %v364, 2147483648
  %v667 = vxor.u32 %v369, 2147483648
  %v668 = vxor.u32 %v374, 2147483648
  %v669 = vxor.u32 %v379, 2147483648
  %v670 = vxor.u32 %v384, 2147483648
  %v671 = vxor.u32 %v389, 2147483648
  %v672 = vxor.u32 %v394, 2147483648
  %v673 = vxor.u32 %v399, 2147483648
  %v674 = vxor.u32 %v404, 2147483648
  %v675 = vxor.u32 %v409, 2147483648
  %v676 = vxor.u32 %v414, 2147483648
  %v677 = vxor.u32 %v419, 2147483648
  %v678 = vxor.u32 %v424, 2147483648
  %v679 = vxor.u32 %v429, 2147483648
  %v680 = vxor.u32 %v434, 2147483648
  %v681 = vxor.u32 %v439, 2147483648
  %v682 = vxor.u32 %v444, 2147483648
  %v683 = vxor.u32 %v449, 2147483648
  %v684 = vxor.u32 %v454, 2147483648
  %v685 = vxor.u32 %v459, 2147483648
  %v686 = vxor.u32 %v464, 2147483648
  %v687 = vxor.u32 %v469, 2147483648
  %v688 = vxor.u32 %v474, 2147483648
  %v689 = vxor.u32 %v479, 2147483648
  %v690 = vxor.u32 %v484, 2147483648
  %v691 = vxor.u32 %v489, 2147483648
  %v692 = vxor.u32 %v494, 2147483648
  %v693 = vxor.u32 %v499, 2147483648
  %v694 = vxor.u32 %v504, 2147483648
  %v695 = vxor.u32 %v509, 2147483648
  %v696 = vxor.u32 %v514, 2147483648
  %v697 = vxor.u32 %v519, 2147483648
  %v698 = vxor.u32 %v524, 2147483648
  %v699 = vxor.u32 %v529, 2147483648
  %v700 = vxor.u32 %v534, 2147483648
  %v701 = vxor.u32 %v539, 2147483648
  %v702 = vxor.u32 %v544, 2147483648
  %v703 = vxor.u32 %v549, 2147483648
  %v704 = vxor.u32 %v554, 2147483648
  %v705 = vxor.u32 %v559, 2147483648
  %v706 = vxor.u32 %v564, 2147483648
  %v707 = vxor.u32 %v569, 2147483648
  %v708 = vxor.u32 %v574, 2147483648
  %v709 = vxor.u32 %v579, 2147483648
  %v710 = vxor.u32 %v584, 2147483648
  %v711 = vxor.u32 %v589, 2147483648
  %v712 = vxor.u32 %v594, 2147483648
  %v713 = vxor.u32 %v599, 2147483648
  %v714 = vxor.u32 %v604, 2147483648
  %v715 = vxor.u32 %v609, 2147483648
  %v716 = vxor.u32 %v614, 2147483648
  %v717 = vxor.u32 %v619, 2147483648
  %v718 = vxor.u32 %v624, 2147483648
  %v719 = vxor.u32 %v629, 2147483648
  %v720 = vxor.u32 %v634, 2147483648
  %v721 = vxor.u32 %v639, 2147483648
  %v722 = vxor.u32 %v644, 2147483648
  %v723 = vxor.u32 %v649, 2147483648
  %v724 = vxor.u32 %v654, 2147483648
  %v725 = vxor.u32 %v659, 2147483648
  %v726 = vmul.f32 %v662, 1.442695
  %v727 = vpow.pop %v726
  %v728 = vmul.f32 %v663, 1.442695
  %v729 = vpow.pop %v728
  %v730 = vmul.f32 %v664, 1.442695
  %v731 = vpow.pop %v730
  %v732 = vmul.f32 %v665, 1.442695
  %v733 = vpow.pop %v732
  %v734 = vmul.f32 %v666, 1.442695
  %v735 = vpow.pop %v734
  %v736 = vmul.f32 %v667, 1.442695
  %v737 = vpow.pop %v736
  %v738 = vmul.f32 %v668, 1.442695
  %v739 = vpow.pop %v738
  %v740 = vmul.f32 %v669, 1.442695
  %v741 = vpow.pop %v740
  %v742 = vmul.f32 %v670, 1.442695
  %v743 = vpow.pop %v742
  %v744 = vmul.f32 %v671, 1.442695
  %v745 = vpow.pop %v744
  %v746 = vmul.f32 %v672, 1.442695
  %v747 = vpow.pop %v746
  %v748 = vmul.f32 %v673, 1.442695
  %v749 = vpow.pop %v748
  %v750 = vmul.f32 %v674, 1.442695
  %v751 = vpow.pop %v750
  %v752 = vmul.f32 %v675, 1.442695
  %v753 = vpow.pop %v752
  %v754 = vmul.f32 %v676, 1.442695
  %v755 = vpow.pop %v754
  %v756 = vmul.f32 %v677, 1.442695
  %v757 = vpow.pop %v756
  %v758 = vmul.f32 %v678, 1.442695
  %v759 = vpow.pop %v758
  %v760 = vmul.f32 %v679, 1.442695
  %v761 = vpow.pop %v760
  %v762 = vmul.f32 %v680, 1.442695
  %v763 = vpow.pop %v762
  %v764 = vmul.f32 %v681, 1.442695
  %v765 = vpow.pop %v764
  %v766 = vmul.f32 %v682, 1.442695
  %v767 = vpow.pop %v766
  %v768 = vmul.f32 %v683, 1.442695
  %v769 = vpow.pop %v768
  %v770 = vmul.f32 %v684, 1.442695
  %v771 = vpow.pop %v770
  %v772 = vmul.f32 %v685, 1.442695
  %v773 = vpow.pop %v772
  %v774 = vmul.f32 %v686, 1.442695
  %v775 = vpow.pop %v774
  %v776 = vmul.f32 %v687, 1.442695
  %v777 = vpow.pop %v776
  %v778 = vmul.f32 %v688, 1.442695
  %v779 = vpow.pop %v778
  %v780 = vmul.f32 %v689, 1.442695
  %v781 = vpow.pop %v780
  %v782 = vmul.f32 %v690, 1.442695
  %v783 = vpow.pop %v782
  %v784 = vmul.f32 %v691, 1.442695
  %v785 = vpow.pop %v784
  %v786 = vmul.f32 %v692, 1.442695
  %v787 = vpow.pop %v786
  %v788 = vmul.f32 %v693, 1.442695
  %v789 = vpow.pop %v788
  %v790 = vmul.f32 %v694, 1.442695
  %v791 = vpow.pop %v790
  %v792 = vmul.f32 %v695, 1.442695
  %v793 = vpow.pop %v792
  %v794 = vmul.f32 %v696, 1.442695
  %v795 = vpow.pop %v794
  %v796 = vmul.f32 %v697, 1.442695
  %v797 = vpow.pop %v796
  %v798 = vmul.f32 %v698, 1.442695
  %v799 = vpow.pop %v798
  %v800 = vmul.f32 %v699, 1.442695
  %v801 = vpow.pop %v800
  %v802 = vmul.f32 %v700, 1.442695
  %v803 = vpow.pop %v802
  %v804 = vmul.f32 %v701, 1.442695
  %v805 = vpow.pop %v804
  %v806 = vmul.f32 %v702, 1.442695
  %v807 = vpow.pop %v806
  %v808 = vmul.f32 %v703, 1.442695
  %v809 = vpow.pop %v808
  %v810 = vmul.f32 %v704, 1.442695
  %v811 = vpow.pop %v810
  %v812 = vmul.f32 %v705, 1.442695
  %v813 = vpow.pop %v812
  %v814 = vmul.f32 %v706, 1.442695
  %v815 = vpow.pop %v814
  %v816 = vmul.f32 %v707, 1.442695
  %v817 = vpow.pop %v816
  %v818 = vmul.f32 %v708, 1.442695
  %v819 = vpow.pop %v818
  %v820 = vmul.f32 %v709, 1.442695
  %v821 = vpow.pop %v820
  %v822 = vmul.f32 %v710, 1.442695
  %v823 = vpow.pop %v822
  %v824 = vmul.f32 %v711, 1.442695
  %v825 = vpow.pop %v824
  %v826 = vmul.f32 %v712, 1.442695
  %v827 = vpow.pop %v826
  %v828 = vmul.f32 %v713, 1.442695
  %v829 = vpow.pop %v828
  %v830 = vmul.f32 %v714, 1.442695
  %v831 = vpow.pop %v830
  %v832 = vmul.f32 %v715, 1.442695
  %v833 = vpow.pop %v832
  %v834 = vmul.f32 %v716, 1.442695
  %v835 = vpow.pop %v834
  %v836 = vmul.f32 %v717, 1.442695
  %v837 = vpow.pop %v836
  %v838 = vmul.f32 %v718, 1.442695
  %v839 = vpow.pop %v838
  %v840 = vmul.f32 %v719, 1.442695
  %v841 = vpow.pop %v840
  %v842 = vmul.f32 %v720, 1.442695
  %v843 = vpow.pop %v842
  %v844 = vmul.f32 %v721, 1.442695
  %v845 = vpow.pop %v844
  %v846 = vmul.f32 %v722, 1.442695
  %v847 = vpow.pop %v846
  %v848 = vmul.f32 %v723, 1.442695
  %v849 = vpow.pop %v848
  %v850 = vmul.f32 %v724, 1.442695
  %v851 = vpow.pop %v850
  %v852 = vmul.f32 %v725, 1.442695
  %v853 = vpow.pop %v852
  %v854 = vadd.f32 %v727, 1.0
  %v855 = vadd.f32 %v729, 1.0
  %v856 = vadd.f32 %v731, 1.0
  %v857 = vadd.f32 %v733, 1.0
  %v858 = vadd.f32 %v735, 1.0
  %v859 = vadd.f32 %v737, 1.0
  %v860 = vadd.f32 %v739, 1.0
  %v861 = vadd.f32 %v741, 1.0
  %v862 = vadd.f32 %v743, 1.0
  %v863 = vadd.f32 %v745, 1.0
  %v864 = vadd.f32 %v747, 1.0
  %v865 = vadd.f32 %v749, 1.0
  %v866 = vadd.f32 %v751, 1.0
  %v867 = vadd.f32 %v753, 1.0
  %v868 = vadd.f32 %v755, 1.0
  %v869 = vadd.f32 %v757, 1.0
  %v870 = vadd.f32 %v759, 1.0
  %v871 = vadd.f32 %v761, 1.0
  %v872 = vadd.f32 %v763, 1.0
  %v873 = vadd.f32 %v765, 1.0
  %v874 = vadd.f32 %v767, 1.0
  %v875 = vadd.f32 %v769, 1.0
  %v876 = vadd.f32 %v771, 1.0
  %v877 = vadd.f32 %v773, 1.0
  %v878 = vadd.f32 %v775, 1.0
  %v879 = vadd.f32 %v777, 1.0
  %v880 = vadd.f32 %v779, 1.0
  %v881 = vadd.f32 %v781, 1.0
  %v882 = vadd.f32 %v783, 1.0
  %v883 = vadd.f32 %v785, 1.0
  %v884 = vadd.f32 %v787, 1.0
  %v885 = vadd.f32 %v789, 1.0
  %v886 = vadd.f32 %v791, 1.0
  %v887 = vadd.f32 %v793, 1.0
  %v888 = vadd.f32 %v795, 1.0
  %v889 = vadd.f32 %v797, 1.0
  %v890 = vadd.f32 %v799, 1.0
  %v891 = vadd.f32 %v801, 1.0
  %v892 = vadd.f32 %v803, 1.0
  %v893 = vadd.f32 %v805, 1.0
  %v894 = vadd.f32 %v807, 1.0
  %v895 = vadd.f32 %v809, 1.0
  %v896 = vadd.f32 %v811, 1.0
  %v897 = vadd.f32 %v813, 1.0
  %v898 = vadd.f32 %v815, 1.0
  %v899 = vadd.f32 %v817, 1.0
  %v900 = vadd.f32 %v819, 1.0
  %v901 = vadd.f32 %v821, 1.0
  %v902 = vadd.f32 %v823, 1.0
  %v903 = vadd.f32 %v825, 1.0
  %v904 = vadd.f32 %v827, 1.0
  %v905 = vadd.f32 %v829, 1.0
  %v906 = vadd.f32 %v831, 1.0
  %v907 = vadd.f32 %v833, 1.0
  %v908 = vadd.f32 %v835, 1.0
  %v909 = vadd.f32 %v837, 1.0
  %v910 = vadd.f32 %v839, 1.0
  %v911 = vadd.f32 %v841, 1.0
  %v912 = vadd.f32 %v843, 1.0
  %v913 = vadd.f32 %v845, 1.0
  %v914 = vadd.f32 %v847, 1.0
  %v915 = vadd.f32 %v849, 1.0
  %v916 = vadd.f32 %v851, 1.0
  %v917 = vadd.f32 %v853, 1.0
  %v918 = vrcp.pop %v854
  %v919 = vmul.f32 1.0, %v918
  %v920 = vrcp.pop %v855
  %v921 = vmul.f32 1.0, %v920
  %v922 = vrcp.pop %v856
  %v923 = vmul.f32 1.0, %v922
  %v924 = vrcp.pop %v857
  %v925 = vmul.f32 1.0, %v924
  %v926 = vrcp.pop %v858
  %v927 = vmul.f32 1.0, %v926
  %v928 = vrcp.pop %v859
  %v929 = vmul.f32 1.0, %v928
  %v930 = vrcp.pop %v860
  %v931 = vmul.f32 1.0, %v930
  %v932 = vrcp.pop %v861
  %v933 = vmul.f32 1.0, %v932
  %v934 = vrcp.pop %v862
  %v935 = vmul.f32 1.0, %v934
  %v936 = vrcp.pop %v863
  %v937 = vmul.f32 1.0, %v936
  %v938 = vrcp.pop %v864
  %v939 = vmul.f32 1.0, %v938
  %v940 = vrcp.pop %v865
  %v941 = vmul.f32 1.0, %v940
  %v942 = vrcp.pop %v866
  %v943 = vmul.f32 1.0, %v942
  %v944 = vrcp.pop %v867
  %v945 = vmul.f32 1.0, %v944
  %v946 = vrcp.pop %v868
  %v947 = vmul.f32 1.0, %v946
  %v948 = vrcp.pop %v869
  %v949 = vmul.f32 1.0, %v948
  %v950 = vrcp.pop %v870
  %v951 = vmul.f32 1.0, %v950
  %v952 = vrcp.pop %v871
  %v953 = vmul.f32 1.0, %v952
  %v954 = vrcp.pop %v872
  %v955 = vmul.f32 1.0, %v954
  %v956 = vrcp.pop %v873
  %v957 = vmul.f32 1.0, %v956
  %v958 = vrcp.pop %v874
  %v959 = vmul.f32 1.0, %v958
  %v960 = vrcp.pop %v875
  %v961 = vmul.f32 1.0, %v960
  %v962 = vrcp.pop %v876
  %v963 = vmul.f32 1.0, %v962
  %v964 = vrcp.pop %v877
  %v965 = vmul.f32 1.0, %v964
  %v966 = vrcp.pop %v878
  %v967 = vmul.f32 1.0, %v966
  %v968 = vrcp.pop %v879
  %v969 = vmul.f32 1.0, %v968
  %v970 = vrcp.pop %v880
  %v971 = vmul.f32 1.0, %v970
  %v972 = vrcp.pop %v881
  %v973 = vmul.f32 1.0, %v972
  %v974 = vrcp.pop %v882
  %v975 = vmul.f32 1.0, %v974
  %v976 = vrcp.pop %v883
  %v977 = vmul.f32 1.0, %v976
  %v978 = vrcp.pop %v884
  %v979 = vmul.f32 1.0, %v978
  %v980 = vrcp.pop %v885
  %v981 = vmul.f32 1.0, %v980
  %v982 = vrcp.pop %v886
  %v983 = vmul.f32 1.0, %v982
  %v984 = vrcp.pop %v887
  %v985 = vmul.f32 1.0, %v984
  %v986 = vrcp.pop %v888
  %v987 = vmul.f32 1.0, %v986
  %v988 = vrcp.pop %v889
  %v989 = vmul.f32 1.0, %v988
  %v990 = vrcp.pop %v890
  %v991 = vmul.f32 1.0, %v990
  %v992 = vrcp.pop %v891
  %v993 = vmul.f32 1.0, %v992
  %v994 = vrcp.pop %v892
  %v995 = vmul.f32 1.0, %v994
  %v996 = vrcp.pop %v893
  %v997 = vmul.f32 1.0, %v996
  %v998 = vrcp.pop %v894
  %v999 = vmul.f32 1.0, %v998
  %v1000 = vrcp.pop %v895
  %v1001 = vmul.f32 1.0, %v1000
  %v1002 = vrcp.pop %v896
  %v1003 = vmul.f32 1.0, %v1002
  %v1004 = vrcp.pop %v897
  %v1005 = vmul.f32 1.0, %v1004
  %v1006 = vrcp.pop %v898
  %v1007 = vmul.f32 1.0, %v1006
  %v1008 = vrcp.pop %v899
  %v1009 = vmul.f32 1.0, %v1008
  %v1010 = vrcp.pop %v900
  %v1011 = vmul.f32 1.0, %v1010
  %v1012 = vrcp.pop %v901
  %v1013 = vmul.f32 1.0, %v1012
  %v1014 = vrcp.pop %v902
  %v1015 = vmul.f32 1.0, %v1014
  %v1016 = vrcp.pop %v903
  %v1017 = vmul.f32 1.0, %v1016
  %v1018 = vrcp.pop %v904
  %v1019 = vmul.f32 1.0, %v1018
  %v1020 = vrcp.pop %v905
  %v1021 = vmul.f32 1.0, %v1020
  %v1022 = vrcp.pop %v906
  %v1023 = vmul.f32 1.0, %v1022
  %v1024 = vrcp.pop %v907
  %v1025 = vmul.f32 1.0, %v1024
  %v1026 = vrcp.pop %v908
  %v1027 = vmul.f32 1.0, %v1026
  %v1028 = vrcp.pop %v909
  %v1029 = vmul.f32 1.0, %v1028
  %v1030 = vrcp.pop %v910
  %v1031 = vmul.f32 1.0, %v1030
  %v1032 = vrcp.pop %v911
  %v1033 = vmul.f32 1.0, %v1032
  %v1034 = vrcp.pop %v912
  %v1035 = vmul.f32 1.0, %v1034
  %v1036 = vrcp.pop %v913
  %v1037 = vmul.f32 1.0, %v1036
  %v1038 = vrcp.pop %v914
  %v1039 = vmul.f32 1.0, %v1038
  %v1040 = vrcp.pop %v915
  %v1041 = vmul.f32 1.0, %v1040
  %v1042 = vrcp.pop %v916
  %v1043 = vmul.f32 1.0, %v1042
  %v1044 = vrcp.pop %v917
  %v1045 = vmul.f32 1.0, %v1044
  %vm1046 = vcmask 97280
  %1047 = vst.msk [vmem:[%s2] sm:$0xff] %vm1046, %v919
  %1048 = vst.msk [vmem:[%s2 + $0x8] sm:$0xff] %vm1046, %v921
  %1049 = vst.msk [vmem:[%s2 + $0x10] sm:$0xff] %vm1046, %v923
  %1050 = vst.msk [vmem:[%s2 + $0x18] sm:$0xff] %vm1046, %v925
  %1051 = vst.msk [vmem:[%s2 + $0x20] sm:$0xff] %vm1046, %v927
  %1052 = vst.msk [vmem:[%s2 + $0x28] sm:$0xff] %vm1046, %v929
  %1053 = vst.msk [vmem:[%s2 + $0x30] sm:$0xff] %vm1046, %v931
  %1054 = vst.msk [vmem:[%s2 + $0x38] sm:$0xff] %vm1046, %v933
  %1055 = vst.msk [vmem:[%s2 + $0x40] sm:$0xff] %vm1046, %v935
  %1056 = vst.msk [vmem:[%s2 + $0x48] sm:$0xff] %vm1046, %v937
  %1057 = vst.msk [vmem:[%s2 + $0x50] sm:$0xff] %vm1046, %v939
  %1058 = vst.msk [vmem:[%s2 + $0x58] sm:$0xff] %vm1046, %v941
  %1059 = vst.msk [vmem:[%s2 + $0x60] sm:$0xff] %vm1046, %v943
  %1060 = vst.msk [vmem:[%s2 + $0x68] sm:$0xff] %vm1046, %v945
  %1061 = vst.msk [vmem:[%s2 + $0x70] sm:$0xff] %vm1046, %v947
  %1062 = vst.msk [vmem:[%s2 + $0x78] sm:$0xff] %vm1046, %v949
  %1063 = vst.msk [vmem:[%s2 + $0x80] sm:$0xff] %vm1046, %v951
  %1064 = vst.msk [vmem:[%s2 + $0x88] sm:$0xff] %vm1046, %v953
  %1065 = vst.msk [vmem:[%s2 + $0x90] sm:$0xff] %vm1046, %v955
  %1066 = vst.msk [vmem:[%s2 + $0x98] sm:$0xff] %vm1046, %v957
  %1067 = vst.msk [vmem:[%s2 + $0xa0] sm:$0xff] %vm1046, %v959
  %1068 = vst.msk [vmem:[%s2 + $0xa8] sm:$0xff] %vm1046, %v961
  %1069 = vst.msk [vmem:[%s2 + $0xb0] sm:$0xff] %vm1046, %v963
  %1070 = vst.msk [vmem:[%s2 + $0xb8] sm:$0xff] %vm1046, %v965
  %1071 = vst.msk [vmem:[%s2 + $0xc0] sm:$0xff] %vm1046, %v967
  %1072 = vst.msk [vmem:[%s2 + $0xc8] sm:$0xff] %vm1046, %v969
  %1073 = vst.msk [vmem:[%s2 + $0xd0] sm:$0xff] %vm1046, %v971
  %1074 = vst.msk [vmem:[%s2 + $0xd8] sm:$0xff] %vm1046, %v973
  %1075 = vst.msk [vmem:[%s2 + $0xe0] sm:$0xff] %vm1046, %v975
  %1076 = vst.msk [vmem:[%s2 + $0xe8] sm:$0xff] %vm1046, %v977
  %1077 = vst.msk [vmem:[%s2 + $0xf0] sm:$0xff] %vm1046, %v979
  %1078 = vst.msk [vmem:[%s2 + $0xf8] sm:$0xff] %vm1046, %v981
  %1079 = vst.msk [vmem:[%s2 + $0x100] sm:$0xff] %vm1046, %v983
  %1080 = vst.msk [vmem:[%s2 + $0x108] sm:$0xff] %vm1046, %v985
  %1081 = vst.msk [vmem:[%s2 + $0x110] sm:$0xff] %vm1046, %v987
  %1082 = vst.msk [vmem:[%s2 + $0x118] sm:$0xff] %vm1046, %v989
  %1083 = vst.msk [vmem:[%s2 + $0x120] sm:$0xff] %vm1046, %v991
  %1084 = vst.msk [vmem:[%s2 + $0x128] sm:$0xff] %vm1046, %v993
  %1085 = vst.msk [vmem:[%s2 + $0x130] sm:$0xff] %vm1046, %v995
  %1086 = vst.msk [vmem:[%s2 + $0x138] sm:$0xff] %vm1046, %v997
  %1087 = vst.msk [vmem:[%s2 + $0x140] sm:$0xff] %vm1046, %v999
  %1088 = vst.msk [vmem:[%s2 + $0x148] sm:$0xff] %vm1046, %v1001
  %1089 = vst.msk [vmem:[%s2 + $0x150] sm:$0xff] %vm1046, %v1003
  %1090 = vst.msk [vmem:[%s2 + $0x158] sm:$0xff] %vm1046, %v1005
  %1091 = vst.msk [vmem:[%s2 + $0x160] sm:$0xff] %vm1046, %v1007
  %1092 = vst.msk [vmem:[%s2 + $0x168] sm:$0xff] %vm1046, %v1009
  %1093 = vst.msk [vmem:[%s2 + $0x170] sm:$0xff] %vm1046, %v1011
  %1094 = vst.msk [vmem:[%s2 + $0x178] sm:$0xff] %vm1046, %v1013
  %1095 = vst.msk [vmem:[%s2 + $0x180] sm:$0xff] %vm1046, %v1015
  %1096 = vst.msk [vmem:[%s2 + $0x188] sm:$0xff] %vm1046, %v1017
  %1097 = vst.msk [vmem:[%s2 + $0x190] sm:$0xff] %vm1046, %v1019
  %1098 = vst.msk [vmem:[%s2 + $0x198] sm:$0xff] %vm1046, %v1021
  %1099 = vst.msk [vmem:[%s2 + $0x1a0] sm:$0xff] %vm1046, %v1023
  %1100 = vst.msk [vmem:[%s2 + $0x1a8] sm:$0xff] %vm1046, %v1025
  %1101 = vst.msk [vmem:[%s2 + $0x1b0] sm:$0xff] %vm1046, %v1027
  %1102 = vst.msk [vmem:[%s2 + $0x1b8] sm:$0xff] %vm1046, %v1029
  %1103 = vst.msk [vmem:[%s2 + $0x1c0] sm:$0xff] %vm1046, %v1031
  %1104 = vst.msk [vmem:[%s2 + $0x1c8] sm:$0xff] %vm1046, %v1033
  %1105 = vst.msk [vmem:[%s2 + $0x1d0] sm:$0xff] %vm1046, %v1035
  %1106 = vst.msk [vmem:[%s2 + $0x1d8] sm:$0xff] %vm1046, %v1037
  %1107 = vst.msk [vmem:[%s2 + $0x1e0] sm:$0xff] %vm1046, %v1039
  %1108 = vst.msk [vmem:[%s2 + $0x1e8] sm:$0xff] %vm1046, %v1041
  %1109 = vst.msk [vmem:[%s2 + $0x1f0] sm:$0xff] %vm1046, %v1043
  %1110 = vst.msk [vmem:[%s2 + $0x1f8] sm:$0xff] %vm1046, %v1045
  // Predicated region
  $region10: #{generator_forward.7} parent=0 // pred_check
    _
  $region11: #{generator_forward.7} parent=0 // pred_check_branch
    %1112 = sbr.rel (0) target = $region13
  $region12: #{generator_forward.7} parent=0 // pred_region
    _
  $region13: #{generator_forward.7} parent=0 // pred_fallthru
    _
  // Predicated region
  $region14: #{generator_forward.7} parent=0 // pred_check
    _
  $region15: #{generator_forward.7} parent=0 // pred_check_branch
    %1114 = sbr.rel (0) target = $region17
  $region16: #{generator_forward.7} parent=0 // pred_region
    _
  $region17: #{generator_forward.7} parent=0 // pred_fallthru
    _

</llo_original>
